<compile_context>
chip_gen: v7x
topology: tpu7x:2x2x1
jax: 0.10.0
libtpu: 0.0.40
codegen_flags: <defaults>
</compile_context>

<pallas_src>
import functools

import jax
import jax.numpy as jnp
from jax.experimental import pallas as pl
from jax.experimental.pallas import tpu as pltpu

_EPS = 1e-5
_LANE = 128


def _round_up(x, m):
    return (x + m - 1) // m * m


def _device_kind():
    try:
        return jax.devices()[0].device_kind.lower()
    except Exception:
        return ""


def _gen_budget_and_cap(max_tile=None):
    """Generation-aware (vmem_limit_bytes, max tile width)."""
    kind = _device_kind()
    if "v7" in kind:
        budget, cap = 48 * 2**20, 512      # 64 MiB physical per TC -> headroom
    elif "v6" in kind or "v5" in kind or "v4" in kind:
        budget, cap = 96 * 2**20, 1024     # 128 MiB physical
    else:
        budget, cap = 32 * 2**20, 512      # unknown / older parts: conservative
    if max_tile is not None:
        cap = max(_LANE, (int(max_tile) // _LANE) * _LANE)
    return budget, cap


def _bn_relu(y, gb):
    """Folded BatchNorm1d(train) + ReLU.  y: (B, T) f32, gb: (2, T) f32 [gamma; beta]."""
    mean = jnp.mean(y, axis=0, keepdims=True)
    d = y - mean                                      # centered, reused for var
    var = jnp.mean(d * d, axis=0, keepdims=True)      # biased variance
    scale = gb[0:1, :] * jax.lax.rsqrt(var + _EPS)    # gamma folded into rsqrt (EUP)
    return jnp.maximum(d * scale + gb[1:2, :], 0.0)   # single FMA + ReLU


def _pack_gb(gamma, beta, dim_p, n, tile):
    """Pack gamma/beta into (n_tiles, 2, tile) f32 so one resident array serves all tiles."""
    g = jnp.pad(gamma.astype(jnp.float32), (0, dim_p - gamma.shape[0]))
    b = jnp.pad(beta.astype(jnp.float32), (0, dim_p - beta.shape[0]))
    return jnp.stack([g, b]).reshape(2, n, tile).transpose(1, 0, 2)


# ----------------------------- fused single-call path ------------------------


def _fused_mlp_kernel(x_hbm, w1_ref, gb1_ref, w2_ref, gb2_ref, o_ref,
                      x_vmem, x_sem, h_ref, *, n1, tn1):
    i = pl.program_id(0)

    # One-time copy of x into a single-buffered VMEM scratch (no pipeline
    # double buffer for an operand whose block never changes).
    @pl.when(i == 0)
    def _load_x():
        cp = pltpu.make_async_copy(x_hbm, x_vmem, x_sem)
        cp.start()
        cp.wait()

    # Phase 1 (i < n1): hidden-feature tile i of layer 1 -> VMEM scratch.
    @pl.when(i < n1)
    def _layer1():
        c = jnp.minimum(i, n1 - 1)
        y = jnp.dot(x_vmem[...], w1_ref[...], preferred_element_type=jnp.float32)
        # Linear bias intentionally omitted: cancelled by BN's mean subtraction.
        h_ref[c] = _bn_relu(y, gb1_ref[c]).astype(h_ref.dtype)

    # Phase 2 (i >= n1): output-feature tile (i - n1) of layer 2 from scratch.
    @pl.when(i >= n1)
    def _layer2():
        j = jnp.maximum(i - n1, 0)
        acc = jnp.dot(h_ref[0], w2_ref[0:tn1, :],
                      preferred_element_type=jnp.float32)
        for c in range(1, n1):          # n1 is small (usually 1) with wide tiles
            acc += jnp.dot(h_ref[c], w2_ref[c * tn1:(c + 1) * tn1, :],
                           preferred_element_type=jnp.float32)
        o_ref[...] = _bn_relu(acc, gb2_ref[j]).astype(o_ref.dtype)


def _fused_tile_plan(B, d_in, hidden, d_out, csize, osize, budget, cap):
    """Pick (tn1, tn2) from an explicit VMEM footprint formula."""
    def footprint(t1, t2):
        hp = _round_up(hidden, t1)
        op = _round_up(d_out, t2)
        return (B * d_in * csize            # x (single VMEM buffer)
                + B * hp * csize            # hidden activation scratch
                + 2 * d_in * t1 * csize     # W1 tile, double-buffered
                + 2 * hp * t2 * csize       # W2 tile, double-buffered
                + 2 * B * t2 * osize        # output tile, double-buffered
                + 4 * (hp + op) * 4)        # packed gamma/beta (f32)
    t1 = max(_LANE, min(cap, _round_up(hidden, _LANE)))
    t2 = max(_LANE, min(cap, _round_up(d_out, _LANE)))
    while footprint(t1, t2) > 0.85 * budget:
        if t1 == _LANE and t2 == _LANE:
            break
        if t2 >= t1 and t2 > _LANE:
            t2 -= _LANE
        else:
            t1 -= _LANE
    return t1, t2


# ----------------------------- two-pass (dual-TC) path -----------------------


def _layer_kernel(x_ref, w_ref, gb_ref, o_ref):
    j = pl.program_id(0)
    y = jnp.dot(x_ref[...], w_ref[...], preferred_element_type=jnp.float32)
    o_ref[...] = _bn_relu(y, gb_ref[j]).astype(o_ref.dtype)


def _layer_tile_plan(B, K, d_out, csize, osize, budget, cap):
    def footprint(t):
        return (2 * B * K * csize + 2 * K * t * csize + 2 * B * t * osize
                + 4 * _round_up(d_out, t) * 4)
    t = max(_LANE, min(cap, _round_up(d_out, _LANE)))
    while footprint(t) > 0.85 * budget and t > _LANE:
        t -= _LANE
    return t


def _linear_bn_relu(xc, w, gamma, beta, tile, out_dtype, vmem_limit):
    """One Linear(+cancelled bias) -> BN(train) -> ReLU layer as a parallel grid."""
    B, K = xc.shape
    d_out = w.shape[1]
    out_p = _round_up(d_out, tile)
    n = out_p // tile
    # Pre-cast + pad in the wrapper so the weight DMAs move the compute dtype.
    wp = jnp.pad(w, ((0, 0), (0, out_p - d_out))).astype(xc.dtype)
    gb = _pack_gb(gamma, beta, out_p, n, tile)
    return pl.pallas_call(
        _layer_kernel,
        out_shape=jax.ShapeDtypeStruct((B, out_p), out_dtype),
        grid_spec=pltpu.PrefetchScalarGridSpec(
            num_scalar_prefetch=0,
            grid=(n,),
            in_specs=[
                pl.BlockSpec((B, K), lambda j: (0, 0)),           # resident activations
                pl.BlockSpec((K, tile), lambda j: (0, j)),        # weight column tile
                pl.BlockSpec((n, 2, tile), lambda j: (0, 0, 0)),  # gamma/beta resident
            ],
            out_specs=pl.BlockSpec((B, tile), lambda j: (0, j)),
        ),
        compiler_params=pltpu.CompilerParams(
            dimension_semantics=("parallel",),   # lets both v7x TCs split the tiles
            vmem_limit_bytes=vmem_limit,
        ),
    )(xc, wp, gb)


# ----------------------------- public wrapper --------------------------------


def projection_mlp(x, params, *, use_bf16_matmul=True, two_pass=None, max_tile=None):
    """Forward pass of projection_MLP.

    use_bf16_matmul: run the matmuls in bf16 on the MXU (BN statistics stay f32).
    two_pass: one pallas_call per layer with a 'parallel' grid.  Auto (None):
      True on v7x to use both TensorCores, False elsewhere where the fused
      single call keeps the hidden activation in VMEM.
    """
    w1, g1, beta1 = params["w1"], params["g1"], params["beta1"]
    w2, g2, beta2 = params["w2"], params["g2"], params["beta2"]
    # params["b1"] / params["b2"] (Linear biases) are cancelled by BN(train)'s
    # mean subtraction and therefore unused by the kernels.  NOTE: if this were
    # reused for eval-mode BN (running stats) the bias would have to be added.

    B, d_in = x.shape
    hidden = w1.shape[1]
    d_out = w2.shape[1]
    out_dtype = x.dtype

    cdt = jnp.bfloat16 if use_bf16_matmul else jnp.float32
    csize = jnp.dtype(cdt).itemsize
    osize = jnp.dtype(out_dtype).itemsize
    budget, cap = _gen_budget_and_cap(max_tile)
    if two_pass is None:
        two_pass = "v7" in _device_kind()

    xc = x.astype(cdt)   # pre-cast in the wrapper: DMAs move the compute dtype

    if two_pass:
        # Layer 1: hidden activation round-trips HBM in the compute dtype.
        t1 = _layer_tile_plan(B, d_in, hidden, csize, csize, budget, cap)
        h = _linear_bn_relu(xc, w1, g1, beta1, t1, cdt, budget)
        hidden_p = h.shape[1]
        # Layer 2 (pad W2 rows to the padded hidden width; padded h columns are 0).
        w2r = jnp.pad(w2, ((0, hidden_p - hidden), (0, 0)))
        t2 = _layer_tile_plan(B, hidden_p, d_out, csize, osize, budget, cap)
        out = _linear_bn_relu(h, w2r, g2, beta2, t2, out_dtype, budget)
        return out[:, :d_out]

    # ---- fused single pallas_call: hidden activation never leaves VMEM ----
    tn1, tn2 = _fused_tile_plan(B, d_in, hidden, d_out, csize, osize, budget, cap)
    hidden_p = _round_up(hidden, tn1)
    out_p = _round_up(d_out, tn2)
    n1, n2 = hidden_p // tn1, out_p // tn2

    # Pre-cast + zero-pad in the wrapper.  Padded features stay exactly 0
    # through Linear + BN + ReLU (gamma = beta = 0 there) and are sliced off.
    w1p = jnp.pad(w1, ((0, 0), (0, hidden_p - hidden))).astype(cdt)
    w2p = jnp.pad(w2, ((0, hidden_p - hidden), (0, out_p - d_out))).astype(cdt)
    gb1 = _pack_gb(g1, beta1, hidden_p, n1, tn1)
    gb2 = _pack_gb(g2, beta2, out_p, n2, tn2)

    kernel = functools.partial(_fused_mlp_kernel, n1=n1, tn1=tn1)

    out_padded = pl.pallas_call(
        kernel,
        out_shape=jax.ShapeDtypeStruct((B, out_p), out_dtype),
        grid_spec=pltpu.PrefetchScalarGridSpec(
            num_scalar_prefetch=0,
            grid=(n1 + n2,),
            in_specs=[
                # x stays in HBM; copied once into a single VMEM scratch buffer.
                pl.BlockSpec(memory_space=pl.ANY),
                # W1 column tile: advances during phase 1, then holds (no re-DMA).
                pl.BlockSpec((d_in, tn1), lambda i: (0, jnp.minimum(i, n1 - 1))),
                # gamma/beta: tiny, fully resident for the whole grid.
                pl.BlockSpec((n1, 2, tn1), lambda i: (0, 0, 0)),
                # W2 column tile: held at 0 during phase 1, advances in phase 2.
                pl.BlockSpec((hidden_p, tn2), lambda i: (0, jnp.maximum(i - n1, 0))),
                pl.BlockSpec((n2, 2, tn2), lambda i: (0, 0, 0)),
            ],
            out_specs=pl.BlockSpec((B, tn2), lambda i: (0, jnp.maximum(i - n1, 0))),
            scratch_shapes=[
                pltpu.VMEM((B, d_in), cdt),        # x, single-buffered
                pltpu.SemaphoreType.DMA,           # x copy completion
                pltpu.VMEM((n1, B, tn1), cdt),     # hidden activation (no HBM trip)
            ],
        ),
        compiler_params=pltpu.CompilerParams(
            # Phase-2 steps depend on all phase-1 steps -> single sequential axis.
            dimension_semantics=("arbitrary",),
            vmem_limit_bytes=budget,
        ),
    )(xc, w1p, gb1, w2p, gb2)

    return out_padded[:, :d_out]


# ----------------------------- params / reference ----------------------------


def init_params(key, in_dim, hidden_size, out_dim, dtype=jnp.float32):
    ks = jax.random.split(key, 8)
    s1 = in_dim ** -0.5
    s2 = hidden_size ** -0.5
    return {
        # Linear weights stored as (in, out) so forward is x @ W (+ b).
        "w1": jax.random.uniform(ks[0], (in_dim, hidden_size), dtype, -s1, s1),
        "b1": jax.random.uniform(ks[1], (hidden_size,), dtype, -s1, s1),
        "g1": 1.0 + 0.1 * jax.random.normal(ks[2], (hidden_size,), dtype),
        "beta1": 0.1 * jax.random.normal(ks[3], (hidden_size,), dtype),
        "w2": jax.random.uniform(ks[4], (hidden_size, out_dim), dtype, -s2, s2),
        "b2": jax.random.uniform(ks[5], (out_dim,), dtype, -s2, s2),
        "g2": 1.0 + 0.1 * jax.random.normal(ks[6], (out_dim,), dtype),
        "beta2": 0.1 * jax.random.normal(ks[7], (out_dim,), dtype),
    }


def _reference(x, p):
    """Pure-JAX reference with the exact PyTorch math (including the Linear bias,
    which the kernels omit because BN(train)'s mean subtraction cancels it)."""
    def layer(x, w, b, g, beta):
        y = x @ w + b
        mean = y.mean(axis=0, keepdims=True)
        var = ((y - mean) ** 2).mean(axis=0, keepdims=True)
        return jnp.maximum((y - mean) / jnp.sqrt(var + _EPS) * g + beta, 0.0)
    h = layer(x, p["w1"], p["b1"], p["g1"], p["beta1"])
    return layer(h, p["w2"], p["b2"], p["g2"], p["beta2"])


if __name__ == "__main__":
    # Small shapes consistent with the module; HIDDEN/OUT_DIM are deliberately
    # not multiples of 128 to exercise padding and the multi-tile paths.
    B, IN_DIM, HIDDEN, OUT_DIM = 16, 32, 320, 200

    key = jax.random.PRNGKey(0)
    kx, kp = jax.random.split(key)
    x = jax.random.normal(kx, (B, IN_DIM), jnp.float32)
    params = init_params(kp, IN_DIM, HIDDEN, OUT_DIM)

    ref = _reference(x, params)

    def _rel(a, b):
        return float(jnp.linalg.norm(a.astype(jnp.float32) - b)
                     / (jnp.linalg.norm(b) + 1e-12))

    # 1) Fused, f32 path, tiny tiles: exercises multi-tile phases, padding and
    #    the chunked layer-2 accumulation; tight comparison.
    out = jax.block_until_ready(jax.jit(functools.partial(
        projection_mlp, use_bf16_matmul=False, two_pass=False, max_tile=128))(x, params))
    assert out.shape == (B, OUT_DIM)
    assert jnp.allclose(out, ref, atol=1e-4, rtol=1e-4), "fused f32 mismatch"

    # 2) Fused, default path (bf16 MXU inputs, generation-aware wide tiles).
    out_bf = jax.block_until_ready(jax.jit(functools.partial(
        projection_mlp, two_pass=False))(x, params))
    assert _rel(out_bf, ref) < 0.05, "fused bf16 relative error too large"

    # 3) Two-pass path (one 'parallel' pallas_call per layer, v7x dual-TC style).
    out_tp = jax.block_until_ready(jax.jit(functools.partial(
        projection_mlp, two_pass=True))(x, params))
    assert _rel(out_tp, ref) < 0.05, "two-pass bf16 relative error too large"

    # 4) Auto-selected path for whatever generation this is running on.
    out_auto = jax.block_until_ready(jax.jit(projection_mlp)(x, params))
    assert out_auto.shape == (B, OUT_DIM)
    assert _rel(out_auto, ref) < 0.05, "auto path relative error too large"

    print("KERNEL_OK")
</pallas_src>

<mosaic_0001>
module attributes {stable_mosaic.version = 11 : i64} {
  func.func @_fused_mlp_kernel(%arg0: i32, %arg1: memref<16x32xf32, #tpu.memory_space<any>>, %arg2: memref<32x128xf32, #tpu.memory_space<vmem>>, %arg3: memref<3x2x128xf32, #tpu.memory_space<vmem>>, %arg4: memref<384x128xf32, #tpu.memory_space<vmem>>, %arg5: memref<2x2x128xf32, #tpu.memory_space<vmem>>, %arg6: memref<16x128xf32, #tpu.memory_space<vmem>>, %arg7: memref<16x32xf32, #tpu.memory_space<vmem>>, %arg8: memref<!tpu.dma_semaphore, #tpu.memory_space<semaphore_mem>>, %arg9: memref<3x16x128xf32, #tpu.memory_space<vmem>>) attributes {dimension_semantics = [#tpu.dimension_semantics<arbitrary>], iteration_bounds = array<i64: 5>, scalar_prefetch = 0 : i64, scratch_operands = 3 : i64, tpu.core_type = #tpu.core_type<tc>, window_params = [{}, {transform_indices = @transform_1, window_bounds = array<i64: 32, 128>}, {pipeline_mode = #tpu.pipeline_mode<synchronous>, transform_indices = @transform_2, window_bounds = array<i64: 3, 2, 128>}, {transform_indices = @transform_3, window_bounds = array<i64: 384, 128>}, {pipeline_mode = #tpu.pipeline_mode<synchronous>, transform_indices = @transform_4, window_bounds = array<i64: 2, 2, 128>}, {transform_indices = @transform_5, window_bounds = array<i64: 16, 128>}]} {
    %c0_i32 = arith.constant 0 : i32
    %0 = arith.cmpi eq, %arg0, %c0_i32 : i32
    %1 = arith.extui %0 : i1 to i32
    %c0_i32_0 = arith.constant 0 : i32
    %2 = arith.cmpi ne, %1, %c0_i32_0 : i32
    scf.if %2 {
      tpu.enqueue_dma source(%arg1 : memref<16x32xf32, #tpu.memory_space<any>>) target(%arg7 : memref<16x32xf32, #tpu.memory_space<vmem>>) target_semaphore(%arg8 : memref<!tpu.dma_semaphore, #tpu.memory_space<semaphore_mem>>)
      tpu.wait_dma2 semaphore(%arg8 : memref<!tpu.dma_semaphore, #tpu.memory_space<semaphore_mem>>) src(%arg1 : memref<16x32xf32, #tpu.memory_space<any>>) dst(%arg7 : memref<16x32xf32, #tpu.memory_space<vmem>>)
    } else {
    }
    %c3_i32 = arith.constant 3 : i32
    %3 = arith.cmpi slt, %arg0, %c3_i32 : i32
    %4 = arith.extui %3 : i1 to i32
    %c0_i32_1 = arith.constant 0 : i32
    %5 = arith.cmpi ne, %4, %c0_i32_1 : i32
    scf.if %5 {
      %c2_i32 = arith.constant 2 : i32
      %9 = arith.minsi %arg0, %c2_i32 : i32
      %c0 = arith.constant 0 : index
      %c0_4 = arith.constant 0 : index
      %10 = vector.load %arg7[%c0, %c0_4] : memref<16x32xf32, #tpu.memory_space<vmem>>, vector<16x32xf32>
      %c0_5 = arith.constant 0 : index
      %c0_6 = arith.constant 0 : index
      %11 = vector.load %arg2[%c0_5, %c0_6] : memref<32x128xf32, #tpu.memory_space<vmem>>, vector<32x128xf32>
      %cst = arith.constant dense<0.000000e+00> : vector<16x128xf32>
      %12 = tpu.matmul %10, %11, %cst {dimension_numbers = #tpu.dot_dimension_numbers<[1], [0], [0], [1], [0, 0, 1, 1], [], []>} : vector<16x32xf32>, vector<32x128xf32>, vector<16x128xf32> -> vector<16x128xf32>
      %13 = arith.index_cast %9 : i32 to index
      %c0_7 = arith.constant 0 : index
      %c0_8 = arith.constant 0 : index
      %14 = vector.load %arg3[%13, %c0_7, %c0_8] : memref<3x2x128xf32, #tpu.memory_space<vmem>>, vector<1x2x128xf32>
      %15 = vector.shape_cast %14 : vector<1x2x128xf32> to vector<2x128xf32>
      %cst_9 = arith.constant dense<0.000000e+00> : vector<128xf32>
      %16 = vector.multi_reduction <add>, %12, %cst_9 [0] : vector<16x128xf32> to vector<128xf32>
      %17 = vector.shape_cast %16 : vector<128xf32> to vector<1x128xf32>
      %cst_10 = arith.constant 1.600000e+01 : f32
      %18 = vector.broadcast %cst_10 : f32 to vector<1x128xf32>
      %19 = arith.divf %17, %18 : vector<1x128xf32>
      %20 = vector.broadcast %19 : vector<1x128xf32> to vector<16x128xf32>
      %21 = arith.subf %12, %20 : vector<16x128xf32>
      %22 = arith.mulf %21, %21 : vector<16x128xf32>
      %cst_11 = arith.constant dense<0.000000e+00> : vector<128xf32>
      %23 = vector.multi_reduction <add>, %22, %cst_11 [0] : vector<16x128xf32> to vector<128xf32>
      %24 = vector.shape_cast %23 : vector<128xf32> to vector<1x128xf32>
      %cst_12 = arith.constant 1.600000e+01 : f32
      %25 = vector.broadcast %cst_12 : f32 to vector<1x128xf32>
      %26 = arith.divf %24, %25 : vector<1x128xf32>
      %27 = vector.extract_strided_slice %15 {offsets = [0, 0], sizes = [1, 128], strides = [1, 1]} : vector<2x128xf32> to vector<1x128xf32>
      %cst_13 = arith.constant 9.99999974E-6 : f32
      %28 = vector.broadcast %cst_13 : f32 to vector<1x128xf32>
      %29 = arith.addf %26, %28 : vector<1x128xf32>
      %30 = math.rsqrt %29 : vector<1x128xf32>
      %31 = arith.mulf %27, %30 : vector<1x128xf32>
      %32 = vector.broadcast %31 : vector<1x128xf32> to vector<16x128xf32>
      %33 = arith.mulf %21, %32 : vector<16x128xf32>
      %34 = vector.extract_strided_slice %15 {offsets = [1, 0], sizes = [1, 128], strides = [1, 1]} : vector<2x128xf32> to vector<1x128xf32>
      %35 = vector.broadcast %34 : vector<1x128xf32> to vector<16x128xf32>
      %36 = arith.addf %33, %35 : vector<16x128xf32>
      %cst_14 = arith.constant 0.000000e+00 : f32
      %37 = vector.broadcast %cst_14 : f32 to vector<16x128xf32>
      %38 = arith.maximumf %36, %37 : vector<16x128xf32>
      %39 = arith.index_cast %9 : i32 to index
      %c0_15 = arith.constant 0 : index
      %c0_16 = arith.constant 0 : index
      %40 = vector.load %arg9[%39, %c0_15, %c0_16] : memref<3x16x128xf32, #tpu.memory_space<vmem>>, vector<1x16x128xf32>
      %41 = vector.shape_cast %40 : vector<1x16x128xf32> to vector<16x128xf32>
      %42 = vector.shape_cast %38 : vector<16x128xf32> to vector<1x16x128xf32>
      tpu.vector_store %arg9[%39, %c0_15, %c0_16], %42 {strides = array<i32>} : memref<3x16x128xf32, #tpu.memory_space<vmem>>, vector<1x16x128xf32>,
    } else {
    }
    %c3_i32_2 = arith.constant 3 : i32
    %6 = arith.cmpi sge, %arg0, %c3_i32_2 : i32
    %7 = arith.extui %6 : i1 to i32
    %c0_i32_3 = arith.constant 0 : i32
    %8 = arith.cmpi ne, %7, %c0_i32_3 : i32
    scf.if %8 {
      %c3_i32_4 = arith.constant 3 : i32
      %9 = arith.subi %arg0, %c3_i32_4 : i32
      %c0_i32_5 = arith.constant 0 : i32
      %10 = arith.maxsi %9, %c0_i32_5 : i32
      %c0 = arith.constant 0 : index
      %c0_6 = arith.constant 0 : index
      %c0_7 = arith.constant 0 : index
      %11 = vector.load %arg9[%c0, %c0_6, %c0_7] : memref<3x16x128xf32, #tpu.memory_space<vmem>>, vector<1x16x128xf32>
      %12 = vector.shape_cast %11 : vector<1x16x128xf32> to vector<16x128xf32>
      %c0_8 = arith.constant 0 : index
      %c0_9 = arith.constant 0 : index
      %13 = vector.load %arg4[%c0_8, %c0_9] : memref<384x128xf32, #tpu.memory_space<vmem>>, vector<128x128xf32>
      %cst = arith.constant dense<0.000000e+00> : vector<16x128xf32>
      %14 = tpu.matmul %12, %13, %cst {dimension_numbers = #tpu.dot_dimension_numbers<[1], [0], [0], [1], [0, 0, 1, 1], [], []>} : vector<16x128xf32>, vector<128x128xf32>, vector<16x128xf32> -> vector<16x128xf32>
      %c1 = arith.constant 1 : index
      %c0_10 = arith.constant 0 : index
      %c0_11 = arith.constant 0 : index
      %15 = vector.load %arg9[%c1, %c0_10, %c0_11] : memref<3x16x128xf32, #tpu.memory_space<vmem>>, vector<1x16x128xf32>
      %16 = vector.shape_cast %15 : vector<1x16x128xf32> to vector<16x128xf32>
      %c128 = arith.constant 128 : index
      %c0_12 = arith.constant 0 : index
      %17 = vector.load %arg4[%c128, %c0_12] : memref<384x128xf32, #tpu.memory_space<vmem>>, vector<128x128xf32>
      %cst_13 = arith.constant dense<0.000000e+00> : vector<16x128xf32>
      %18 = tpu.matmul %16, %17, %cst_13 {dimension_numbers = #tpu.dot_dimension_numbers<[1], [0], [0], [1], [0, 0, 1, 1], [], []>} : vector<16x128xf32>, vector<128x128xf32>, vector<16x128xf32> -> vector<16x128xf32>
      %19 = arith.addf %14, %18 : vector<16x128xf32>
      %c2 = arith.constant 2 : index
      %c0_14 = arith.constant 0 : index
      %c0_15 = arith.constant 0 : index
      %20 = vector.load %arg9[%c2, %c0_14, %c0_15] : memref<3x16x128xf32, #tpu.memory_space<vmem>>, vector<1x16x128xf32>
      %21 = vector.shape_cast %20 : vector<1x16x128xf32> to vector<16x128xf32>
      %c256 = arith.constant 256 : index
      %c0_16 = arith.constant 0 : index
      %22 = vector.load %arg4[%c256, %c0_16] : memref<384x128xf32, #tpu.memory_space<vmem>>, vector<128x128xf32>
      %cst_17 = arith.constant dense<0.000000e+00> : vector<16x128xf32>
      %23 = tpu.matmul %21, %22, %cst_17 {dimension_numbers = #tpu.dot_dimension_numbers<[1], [0], [0], [1], [0, 0, 1, 1], [], []>} : vector<16x128xf32>, vector<128x128xf32>, vector<16x128xf32> -> vector<16x128xf32>
      %24 = arith.addf %19, %23 : vector<16x128xf32>
      %25 = arith.index_cast %10 : i32 to index
      %c0_18 = arith.constant 0 : index
      %c0_19 = arith.constant 0 : index
      %26 = vector.load %arg5[%25, %c0_18, %c0_19] : memref<2x2x128xf32, #tpu.memory_space<vmem>>, vector<1x2x128xf32>
      %27 = vector.shape_cast %26 : vector<1x2x128xf32> to vector<2x128xf32>
      %cst_20 = arith.constant dense<0.000000e+00> : vector<128xf32>
      %28 = vector.multi_reduction <add>, %24, %cst_20 [0] : vector<16x128xf32> to vector<128xf32>
      %29 = vector.shape_cast %28 : vector<128xf32> to vector<1x128xf32>
      %cst_21 = arith.constant 1.600000e+01 : f32
      %30 = vector.broadcast %cst_21 : f32 to vector<1x128xf32>
      %31 = arith.divf %29, %30 : vector<1x128xf32>
      %32 = vector.broadcast %31 : vector<1x128xf32> to vector<16x128xf32>
      %33 = arith.subf %24, %32 : vector<16x128xf32>
      %34 = arith.mulf %33, %33 : vector<16x128xf32>
      %cst_22 = arith.constant dense<0.000000e+00> : vector<128xf32>
      %35 = vector.multi_reduction <add>, %34, %cst_22 [0] : vector<16x128xf32> to vector<128xf32>
      %36 = vector.shape_cast %35 : vector<128xf32> to vector<1x128xf32>
      %cst_23 = arith.constant 1.600000e+01 : f32
      %37 = vector.broadcast %cst_23 : f32 to vector<1x128xf32>
      %38 = arith.divf %36, %37 : vector<1x128xf32>
      %39 = vector.extract_strided_slice %27 {offsets = [0, 0], sizes = [1, 128], strides = [1, 1]} : vector<2x128xf32> to vector<1x128xf32>
      %cst_24 = arith.constant 9.99999974E-6 : f32
      %40 = vector.broadcast %cst_24 : f32 to vector<1x128xf32>
      %41 = arith.addf %38, %40 : vector<1x128xf32>
      %42 = math.rsqrt %41 : vector<1x128xf32>
      %43 = arith.mulf %39, %42 : vector<1x128xf32>
      %44 = vector.broadcast %43 : vector<1x128xf32> to vector<16x128xf32>
      %45 = arith.mulf %33, %44 : vector<16x128xf32>
      %46 = vector.extract_strided_slice %27 {offsets = [1, 0], sizes = [1, 128], strides = [1, 1]} : vector<2x128xf32> to vector<1x128xf32>
      %47 = vector.broadcast %46 : vector<1x128xf32> to vector<16x128xf32>
      %48 = arith.addf %45, %47 : vector<16x128xf32>
      %cst_25 = arith.constant 0.000000e+00 : f32
      %49 = vector.broadcast %cst_25 : f32 to vector<16x128xf32>
      %50 = arith.maximumf %48, %49 : vector<16x128xf32>
      %c0_26 = arith.constant 0 : index
      %c0_27 = arith.constant 0 : index
      %51 = vector.load %arg6[%c0_26, %c0_27] : memref<16x128xf32, #tpu.memory_space<vmem>>, vector<16x128xf32>
      tpu.vector_store %arg6[%c0_26, %c0_27], %50 {strides = array<i32>} : memref<16x128xf32, #tpu.memory_space<vmem>>, vector<16x128xf32>,
    } else {
    }
    return
  }
  func.func @transform_1(%arg0: i32) -> (i32, i32) {
    %c2_i32 = arith.constant 2 : i32
    %0 = arith.minsi %arg0, %c2_i32 : i32
    %c0_i32 = arith.constant 0 : i32
    %c0_i32_0 = arith.constant 0 : i32
    return %c0_i32, %0 : i32, i32
  }
  func.func @transform_2(%arg0: i32) -> (i32, i32, i32) {
    %c0_i32 = arith.constant 0 : i32
    %c0_i32_0 = arith.constant 0 : i32
    %c0_i32_1 = arith.constant 0 : i32
    %c0_i32_2 = arith.constant 0 : i32
    return %c0_i32, %c0_i32_0, %c0_i32_1 : i32, i32, i32
  }
  func.func @transform_3(%arg0: i32) -> (i32, i32) {
    %c3_i32 = arith.constant 3 : i32
    %0 = arith.subi %arg0, %c3_i32 : i32
    %c0_i32 = arith.constant 0 : i32
    %1 = arith.maxsi %0, %c0_i32 : i32
    %c0_i32_0 = arith.constant 0 : i32
    %c0_i32_1 = arith.constant 0 : i32
    return %c0_i32_0, %1 : i32, i32
  }
  func.func @transform_4(%arg0: i32) -> (i32, i32, i32) {
    %c0_i32 = arith.constant 0 : i32
    %c0_i32_0 = arith.constant 0 : i32
    %c0_i32_1 = arith.constant 0 : i32
    %c0_i32_2 = arith.constant 0 : i32
    return %c0_i32, %c0_i32_0, %c0_i32_1 : i32, i32, i32
  }
  func.func @transform_5(%arg0: i32) -> (i32, i32) {
    %c3_i32 = arith.constant 3 : i32
    %0 = arith.subi %arg0, %c3_i32 : i32
    %c0_i32 = arith.constant 0 : i32
    %1 = arith.maxsi %0, %c0_i32 : i32
    %c0_i32_0 = arith.constant 0 : i32
    %c0_i32_1 = arith.constant 0 : i32
    return %c0_i32_0, %1 : i32, i32
  }
}

</mosaic_0001>

<llo_original>
// kernel: projection_mlp.1
$region0: #{projection_mlp.1}
  #allocation0 [shape = 'u32[]', space=smem, size = 0x4, offset = 0x4, fixed_abs, tag = 'smem constant byte address 0x4 - core index']
  #allocation1 [shape = 'u32[144,128]{1,0:T(1,128)}', space=vmem, size = 0x12000, scoped, tag = 'internal scratch']
  #allocation2 [shape = 'f32[16,32]{1,0:T(8,128)}', space=vmem, size = 0x2000, scoped, tag = 'scratch operand']
  #allocation3 [shape = 's32[1]{0}', space=sflag, size = 0x4, scoped, tag = 'scratch operand']
  #allocation4 [shape = 'f32[3,16,128]{2,1,0:T(8,128)}', space=vmem, size = 0x6000, scoped, tag = 'scratch operand']
  #allocation9 [shape = 's32[]', space=sflag, size = 0x4, offset = 0, fixed_abs, tag = 'sflag constant byte address 0x0 - dummy sync flag']
  %s0 = inlined_call_operand.vmem [shape: f32[16,32], index: 0, kind: input, shape index: {}]
  %s1 = inlined_call_operand.vmem [shape: f32[32,384], index: 1, kind: input, shape index: {}]
  %s2 = inlined_call_operand.vmem [shape: f32[3,2,128], index: 2, kind: input, shape index: {}]
  %s3 = inlined_call_operand.vmem [shape: f32[384,256], index: 3, kind: input, shape index: {}]
  %s4 = inlined_call_operand.vmem [shape: f32[2,2,128], index: 4, kind: input, shape index: {}]
  %s5 = inlined_call_operand.hbm [shape: f32[16,256], index: 5, kind: output, shape index: {}]
  %s6 = sld [smem:[#allocation0]]
  $region171: #{projection_mlp.1} parent=0
    _
  %s8 = ssub.s32 1, %s6
  %s9 = scalar_select 0, %s8, %s6
  $region1: #{projection_mlp.1} parent=0
    #allocation5 [shape = 'u8[32768]{0}', space=vmem, size = 0x8000, scoped, tag = 'input window, operand 1']
    #allocation6 [shape = 'u8[393216]{0}', space=vmem, size = 0x60000, scoped, tag = 'input window, operand 3']
    #allocation7 [shape = 'u8[16384]{0}', space=vmem, size = 0x4000, scoped, tag = 'output window, operand 0']
    #allocation8 [shape = 's32[2]{0}', space=sflag, size = 0x8, scoped, tag = 'scoped memory for projection_mlp.1']
    %10 = vsyncpa [#allocation8], 0
    %s11 = scalar_lea.sflag [#allocation8], 1
    %12 = vsyncpa %s11, 0
    loop: start=0, step=1, limit=7
    $region2: #{projection_mlp.1} parent=1 // loop_pre_header
      _
    $region3: #{projection_mlp.1} parent=1 // loop_header
      %s14 = sphi 0, %s18
      %p15 = scmp.ge.s32.totalorder %s14, 7
      %s28 = sphi 0, %s30
      %s31 = sphi 0, %s28
      %s32 = sphi 0, %s31
      %s48 = sphi 0, %s32
      %s52 = sphi 0, %s52
      %s54 = sphi 0, %s52
      %s55 = sphi 0, %s54
      %s69 = sphi 0, %s55
      %s81 = sphi 0, %s83
      %s84 = sphi 0, %s81
      %s85 = sphi 0, %s84
      %s101 = sphi 0, %s85
      %s105 = sphi 0, %s105
      %s107 = sphi 0, %s105
      %s108 = sphi 0, %s107
      %s122 = sphi 0, %s108
      %s134 = sphi 0, %s136
      %s137 = sphi 0, %s134
      %s138 = sphi 0, %s137
      %s154 = sphi 0, %s138
    $region4: #{projection_mlp.1} parent=1 // loop_header_branch
      %17 = sbr.rel (%p15) target = $region8
    $region5: #{projection_mlp.1} parent=1 // loop_body
      %s19 = ssub.s32 %s14, 1
      %s20 = ssub.s32 %s14, 2
      %s21 = sadd.s32 %s14, 1
      %p22 = scmp.lt.s32.totalorder %s14, 2
      %s23 = scalar_select %p22, %s14, 2
      %p24 = scmp.lt.s32.totalorder %s21, 2
      %s25 = scalar_select %p24, %s21, 2
      %s26 = ssub.s32 %s23, %s25
      %p27 = scmp.eq.s32.totalorder %s26, 0
      %s29 = sadd.s32 %s28, 1
      %s30 = scalar_select %p27, %s28, %s29
      %p33 = pneg %p27
      %p34 = scmp.eq.s32.totalorder %s14, 4
      %p35 = por %p33, %p34
      %p36 = scmp.ne.s32.totalorder %s28, %s31
      %p37 = scmp.eq.s32.totalorder %s14, 0
      %p38 = por %p36, %p37
      %p39 = scmp.ne.s32.totalorder %s28, %s31
      %p40 = scmp.eq.s32.totalorder %s19, 4
      %p41 = por %p39, %p40
      %p42 = scmp.ne.s32.totalorder %s31, %s32
      %p43 = scmp.eq.s32.totalorder %s19, 0
      %p44 = por %p42, %p43
      %p45 = scmp.ne.s32.totalorder %s31, %s32
      %p46 = scmp.eq.s32.totalorder %s20, 4
      %p47 = por %p45, %p46
      %p49 = scmp.ne.s32.totalorder %s32, %s48
      %p50 = scmp.eq.s32.totalorder %s20, 0
      %p51 = por %p49, %p50
      %s53 = sadd.s32 %s52, 1
      %p56 = scmp.eq.s32.totalorder %s14, 4
      %p57 = scmp.ne.s32.totalorder %s52, %s54
      %p58 = scmp.eq.s32.totalorder %s14, 0
      %p59 = por %p57, %p58
      %p60 = scmp.ne.s32.totalorder %s52, %s54
      %p61 = scmp.eq.s32.totalorder %s19, 4
      %p62 = por %p60, %p61
      %p63 = scmp.ne.s32.totalorder %s54, %s55
      %p64 = scmp.eq.s32.totalorder %s19, 0
      %p65 = por %p63, %p64
      %p66 = scmp.ne.s32.totalorder %s54, %s55
      %p67 = scmp.eq.s32.totalorder %s20, 4
      %p68 = por %p66, %p67
      %p70 = scmp.ne.s32.totalorder %s55, %s69
      %p71 = scmp.eq.s32.totalorder %s20, 0
      %p72 = por %p70, %p71
      %s73 = ssub.s32 %s14, 3
      %p74 = scmp.gt.s32.totalorder %s73, 0
      %s75 = scalar_select %p74, %s73, 0
      %s76 = ssub.s32 %s21, 3
      %p77 = scmp.gt.s32.totalorder %s76, 0
      %s78 = scalar_select %p77, %s76, 0
      %s79 = ssub.s32 %s75, %s78
      %p80 = scmp.eq.s32.totalorder %s79, 0
      %s82 = sadd.s32 %s81, 1
      %s83 = scalar_select %p80, %s81, %s82
      %p86 = pneg %p80
      %p87 = scmp.eq.s32.totalorder %s14, 4
      %p88 = por %p86, %p87
      %p89 = scmp.ne.s32.totalorder %s81, %s84
      %p90 = scmp.eq.s32.totalorder %s14, 0
      %p91 = por %p89, %p90
      %p92 = scmp.ne.s32.totalorder %s81, %s84
      %p93 = scmp.eq.s32.totalorder %s19, 4
      %p94 = por %p92, %p93
      %p95 = scmp.ne.s32.totalorder %s84, %s85
      %p96 = scmp.eq.s32.totalorder %s19, 0
      %p97 = por %p95, %p96
      %p98 = scmp.ne.s32.totalorder %s84, %s85
      %p99 = scmp.eq.s32.totalorder %s20, 4
      %p100 = por %p98, %p99
      %p102 = scmp.ne.s32.totalorder %s85, %s101
      %p103 = scmp.eq.s32.totalorder %s20, 0
      %p104 = por %p102, %p103
      %s106 = sadd.s32 %s105, 1
      %p109 = scmp.eq.s32.totalorder %s14, 4
      %p110 = scmp.ne.s32.totalorder %s105, %s107
      %p111 = scmp.eq.s32.totalorder %s14, 0
      %p112 = por %p110, %p111
      %p113 = scmp.ne.s32.totalorder %s105, %s107
      %p114 = scmp.eq.s32.totalorder %s19, 4
      %p115 = por %p113, %p114
      %p116 = scmp.ne.s32.totalorder %s107, %s108
      %p117 = scmp.eq.s32.totalorder %s19, 0
      %p118 = por %p116, %p117
      %p119 = scmp.ne.s32.totalorder %s107, %s108
      %p120 = scmp.eq.s32.totalorder %s20, 4
      %p121 = por %p119, %p120
      %p123 = scmp.ne.s32.totalorder %s108, %s122
      %p124 = scmp.eq.s32.totalorder %s20, 0
      %p125 = por %p123, %p124
      %s126 = ssub.s32 %s14, 3
      %p127 = scmp.gt.s32.totalorder %s126, 0
      %s128 = scalar_select %p127, %s126, 0
      %s129 = ssub.s32 %s21, 3
      %p130 = scmp.gt.s32.totalorder %s129, 0
      %s131 = scalar_select %p130, %s129, 0
      %s132 = ssub.s32 %s128, %s131
      %p133 = scmp.eq.s32.totalorder %s132, 0
      %s135 = sadd.s32 %s134, 1
      %s136 = scalar_select %p133, %s134, %s135
      %p139 = pneg %p133
      %p140 = scmp.eq.s32.totalorder %s14, 4
      %p141 = por %p139, %p140
      %p142 = scmp.ne.s32.totalorder %s134, %s137
      %p143 = scmp.eq.s32.totalorder %s14, 0
      %p144 = por %p142, %p143
      %p145 = scmp.ne.s32.totalorder %s134, %s137
      %p146 = scmp.eq.s32.totalorder %s19, 4
      %p147 = por %p145, %p146
      %p148 = scmp.ne.s32.totalorder %s137, %s138
      %p149 = scmp.eq.s32.totalorder %s19, 0
      %p150 = por %p148, %p149
      %p151 = scmp.ne.s32.totalorder %s137, %s138
      %p152 = scmp.eq.s32.totalorder %s20, 4
      %p153 = por %p151, %p152
      %p155 = scmp.ne.s32.totalorder %s138, %s154
      %p156 = scmp.eq.s32.totalorder %s20, 0
      %p157 = por %p155, %p156
      %p158 = scmp.le.s32.totalorder 1, %s14
      %p159 = scmp.lt.s32.totalorder %s14, 6
      %p160 = pnand %p158, %p159
      %p161 = pneg %p160
      // Predicated region
      $region9: #{projection_mlp.1} parent=5 // pred_check
        _
      $region10: #{projection_mlp.1} parent=5 // pred_check_branch
        %163 = sbr.rel (%p160) target = $region12
      $region11: #{projection_mlp.1} parent=5 // pred_region
        %s164 = ssub.s32 %s14, 1
        // Predicated region
        $region13: #{projection_mlp.1} parent=11 // pred_check
          %p165 = pneg %p65
        $region14: #{projection_mlp.1} parent=11 // pred_check_branch
          %167 = sbr.rel (%p165) target = $region16
        $region15: #{projection_mlp.1} parent=11 // pred_region
          _
        $region16: #{projection_mlp.1} parent=11 // pred_fallthru
          _
        // Predicated region
        $region17: #{projection_mlp.1} parent=11 // pred_check
          %p168 = pneg %p118
        $region18: #{projection_mlp.1} parent=11 // pred_check_branch
          %170 = sbr.rel (%p168) target = $region20
        $region19: #{projection_mlp.1} parent=11 // pred_region
          _
        $region20: #{projection_mlp.1} parent=11 // pred_fallthru
          _
      $region12: #{projection_mlp.1} parent=5 // pred_fallthru
        _
      %p171 = scmp.lt.s32.totalorder %s14, 5
      // Predicated region
      $region21: #{projection_mlp.1} parent=5 // pred_check
        %p172 = pneg %p171
      $region22: #{projection_mlp.1} parent=5 // pred_check_branch
        %174 = sbr.rel (%p172) target = $region24
      $region23: #{projection_mlp.1} parent=5 // pred_region
        // Predicated region
        $region25: #{projection_mlp.1} parent=23 // pred_check
          %p175 = pneg %p38
        $region26: #{projection_mlp.1} parent=23 // pred_check_branch
          %177 = sbr.rel (%p175) target = $region28
        $region27: #{projection_mlp.1} parent=23 // pred_region
          %s178 = sand.u32 %s28, 1
          %s179 = sand.u32 %s28, 1
          %s180 = smul.addr %s179, 32
          %s181 = scalar_lea.vmem [#allocation5], %s180
          %p182 = scmp.lt.s32.totalorder %s14, 2
          %s183 = scalar_select %p182, %s14, 2
          %s184 = smul.addr %s183, 8
          %s185 = scalar_lea.vmem %s1, %s184
          // Predicated region
          $region29: #{projection_mlp.1} parent=27 // pred_check
            _
          $region30: #{projection_mlp.1} parent=27 // pred_check_branch
            %187 = sbr.rel (0) target = $region32
          $region31: #{projection_mlp.1} parent=27 // pred_region
            // Predicated region
            $region33: #{projection_mlp.1} parent=31 // pred_check
              _
            $region34: #{projection_mlp.1} parent=31 // pred_check_branch
              %189 = sbr.rel (0) target = $region36
            $region35: #{projection_mlp.1} parent=31 // pred_region
              // Predicated region
              $region48: #{projection_mlp.1} parent=35 // pred_check
                _
              $region49: #{projection_mlp.1} parent=35 // pred_check_branch
                %210 = sbr.rel (0) target = $region51
              $region50: #{projection_mlp.1} parent=35 // pred_region
                loop: start=0, step=1, limit=1
                $region52: #{projection_mlp.1} parent=50 // loop_pre_header
                  _
                $region53: #{projection_mlp.1} parent=50 // loop_header
                  %s212 = sphi 0, %s216
                  %p213 = scmp.ge.s32.totalorder %s212, 1
                  %s217 = sphi %s185, %s185
                  %s218 = sphi %s181, %s181
                $region54: #{projection_mlp.1} parent=50 // loop_header_branch
                  %215 = sbr.rel (%p213) target = $region58
                $region55: #{projection_mlp.1} parent=50 // loop_body
                  %v219 = vld [vmem:[%s217] sm:$0xff]
                  %220 = vst [vmem:[%s218] sm:$0xff] %v219
                  %v221 = vld [vmem:[%s217 + $0x18] sm:$0xff]
                  %222 = vst [vmem:[%s218 + $0x8] sm:$0xff] %v221
                  %v223 = vld [vmem:[%s217 + $0x30] sm:$0xff]
                  %224 = vst [vmem:[%s218 + $0x10] sm:$0xff] %v223
                  %v225 = vld [vmem:[%s217 + $0x48] sm:$0xff]
                  %226 = vst [vmem:[%s218 + $0x18] sm:$0xff] %v225
                $region56: #{projection_mlp.1} parent=50 // loop_footer
                  %s216 = sadd.s32 1, %s212
                $region57: #{projection_mlp.1} parent=50 // loop_footer_branch
                  %211 = sbr.rel target = $region53
                $region58: #{projection_mlp.1} parent=50 // loop_exit
                  _
              $region51: #{projection_mlp.1} parent=35 // pred_fallthru
                _
              // Predicated region
              $region59: #{projection_mlp.1} parent=35 // pred_check
                _
              $region60: #{projection_mlp.1} parent=35 // pred_check_branch
                %228 = sbr.rel target = $region62
              $region61: #{projection_mlp.1} parent=35 // pred_region
                _
              $region62: #{projection_mlp.1} parent=35 // pred_fallthru
                _
            $region36: #{projection_mlp.1} parent=31 // pred_fallthru
              _
            // Predicated region
            $region37: #{projection_mlp.1} parent=31 // pred_check
              _
            $region38: #{projection_mlp.1} parent=31 // pred_check_branch
              %191 = sbr.rel target = $region40
            $region39: #{projection_mlp.1} parent=31 // pred_region
              loop: start=0, step=1, limit=1
              $region41: #{projection_mlp.1} parent=39 // loop_pre_header
                _
              $region42: #{projection_mlp.1} parent=39 // loop_header
                %s194 = sphi 0, %s198
                %p195 = scmp.ge.s32.totalorder %s194, 1
                %s199 = sphi %s185, %s185
                %s200 = sphi %s181, %s181
              $region43: #{projection_mlp.1} parent=39 // loop_header_branch
                %197 = sbr.rel (%p195) target = $region47
              $region44: #{projection_mlp.1} parent=39 // loop_body
                %v201 = vld [vmem:[%s199] sm:$0xff]
                %202 = vst [vmem:[%s200] sm:$0xff] %v201
                %v203 = vld [vmem:[%s199 + $0x18] sm:$0xff]
                %204 = vst [vmem:[%s200 + $0x8] sm:$0xff] %v203
                %v205 = vld [vmem:[%s199 + $0x30] sm:$0xff]
                %206 = vst [vmem:[%s200 + $0x10] sm:$0xff] %v205
                %v207 = vld [vmem:[%s199 + $0x48] sm:$0xff]
                %208 = vst [vmem:[%s200 + $0x18] sm:$0xff] %v207
              $region45: #{projection_mlp.1} parent=39 // loop_footer
                %s198 = sadd.s32 1, %s194
              $region46: #{projection_mlp.1} parent=39 // loop_footer_branch
                %193 = sbr.rel target = $region42
              $region47: #{projection_mlp.1} parent=39 // loop_exit
                _
            $region40: #{projection_mlp.1} parent=31 // pred_fallthru
              _
          $region32: #{projection_mlp.1} parent=27 // pred_fallthru
            _
          %229 = vnop
        $region28: #{projection_mlp.1} parent=23 // pred_fallthru
          _
        // Predicated region
        $region63: #{projection_mlp.1} parent=23 // pred_check
          %p230 = pneg %p91
        $region64: #{projection_mlp.1} parent=23 // pred_check_branch
          %232 = sbr.rel (%p230) target = $region66
        $region65: #{projection_mlp.1} parent=23 // pred_region
          %s233 = sand.u32 %s81, 1
          %s234 = sand.u32 %s81, 1
          %s235 = smul.addr %s234, 384
          %s236 = scalar_lea.vmem [#allocation6], %s235
          %s237 = ssub.s32 %s14, 3
          %p238 = scmp.gt.s32.totalorder %s237, 0
          %s239 = scalar_select %p238, %s237, 0
          %s240 = smul.addr %s239, 8
          %s241 = scalar_lea.vmem %s3, %s240
          // Predicated region
          $region67: #{projection_mlp.1} parent=65 // pred_check
            _
          $region68: #{projection_mlp.1} parent=65 // pred_check_branch
            %243 = sbr.rel (0) target = $region70
          $region69: #{projection_mlp.1} parent=65 // pred_region
            // Predicated region
            $region71: #{projection_mlp.1} parent=69 // pred_check
              _
            $region72: #{projection_mlp.1} parent=69 // pred_check_branch
              %245 = sbr.rel (0) target = $region74
            $region73: #{projection_mlp.1} parent=69 // pred_region
              // Predicated region
              $region86: #{projection_mlp.1} parent=73 // pred_check
                _
              $region87: #{projection_mlp.1} parent=73 // pred_check_branch
                %354 = sbr.rel (0) target = $region89
              $region88: #{projection_mlp.1} parent=73 // pred_region
                loop: start=0, step=1, limit=1
                $region90: #{projection_mlp.1} parent=88 // loop_pre_header
                  _
                $region91: #{projection_mlp.1} parent=88 // loop_header
                  %s356 = sphi 0, %s360
                  %p357 = scmp.ge.s32.totalorder %s356, 1
                  %s361 = sphi %s241, %s241
                  %s362 = sphi %s236, %s236
                $region92: #{projection_mlp.1} parent=88 // loop_header_branch
                  %359 = sbr.rel (%p357) target = $region96
                $region93: #{projection_mlp.1} parent=88 // loop_body
                  %v363 = vld [vmem:[%s361] sm:$0xff]
                  %364 = vst [vmem:[%s362] sm:$0xff] %v363
                  %v365 = vld [vmem:[%s361 + $0x10] sm:$0xff]
                  %366 = vst [vmem:[%s362 + $0x8] sm:$0xff] %v365
                  %v367 = vld [vmem:[%s361 + $0x20] sm:$0xff]
                  %368 = vst [vmem:[%s362 + $0x10] sm:$0xff] %v367
                  %v369 = vld [vmem:[%s361 + $0x30] sm:$0xff]
                  %370 = vst [vmem:[%s362 + $0x18] sm:$0xff] %v369
                  %v371 = vld [vmem:[%s361 + $0x40] sm:$0xff]
                  %372 = vst [vmem:[%s362 + $0x20] sm:$0xff] %v371
                  %v373 = vld [vmem:[%s361 + $0x50] sm:$0xff]
                  %374 = vst [vmem:[%s362 + $0x28] sm:$0xff] %v373
                  %v375 = vld [vmem:[%s361 + $0x60] sm:$0xff]
                  %376 = vst [vmem:[%s362 + $0x30] sm:$0xff] %v375
                  %v377 = vld [vmem:[%s361 + $0x70] sm:$0xff]
                  %378 = vst [vmem:[%s362 + $0x38] sm:$0xff] %v377
                  %v379 = vld [vmem:[%s361 + $0x80] sm:$0xff]
                  %380 = vst [vmem:[%s362 + $0x40] sm:$0xff] %v379
                  %v381 = vld [vmem:[%s361 + $0x90] sm:$0xff]
                  %382 = vst [vmem:[%s362 + $0x48] sm:$0xff] %v381
                  %v383 = vld [vmem:[%s361 + $0xa0] sm:$0xff]
                  %384 = vst [vmem:[%s362 + $0x50] sm:$0xff] %v383
                  %v385 = vld [vmem:[%s361 + $0xb0] sm:$0xff]
                  %386 = vst [vmem:[%s362 + $0x58] sm:$0xff] %v385
                  %v387 = vld [vmem:[%s361 + $0xc0] sm:$0xff]
                  %388 = vst [vmem:[%s362 + $0x60] sm:$0xff] %v387
                  %v389 = vld [vmem:[%s361 + $0xd0] sm:$0xff]
                  %390 = vst [vmem:[%s362 + $0x68] sm:$0xff] %v389
                  %v391 = vld [vmem:[%s361 + $0xe0] sm:$0xff]
                  %392 = vst [vmem:[%s362 + $0x70] sm:$0xff] %v391
                  %v393 = vld [vmem:[%s361 + $0xf0] sm:$0xff]
                  %394 = vst [vmem:[%s362 + $0x78] sm:$0xff] %v393
                  %v395 = vld [vmem:[%s361 + $0x100] sm:$0xff]
                  %396 = vst [vmem:[%s362 + $0x80] sm:$0xff] %v395
                  %v397 = vld [vmem:[%s361 + $0x110] sm:$0xff]
                  %398 = vst [vmem:[%s362 + $0x88] sm:$0xff] %v397
                  %v399 = vld [vmem:[%s361 + $0x120] sm:$0xff]
                  %400 = vst [vmem:[%s362 + $0x90] sm:$0xff] %v399
                  %v401 = vld [vmem:[%s361 + $0x130] sm:$0xff]
                  %402 = vst [vmem:[%s362 + $0x98] sm:$0xff] %v401
                  %v403 = vld [vmem:[%s361 + $0x140] sm:$0xff]
                  %404 = vst [vmem:[%s362 + $0xa0] sm:$0xff] %v403
                  %v405 = vld [vmem:[%s361 + $0x150] sm:$0xff]
                  %406 = vst [vmem:[%s362 + $0xa8] sm:$0xff] %v405
                  %v407 = vld [vmem:[%s361 + $0x160] sm:$0xff]
                  %408 = vst [vmem:[%s362 + $0xb0] sm:$0xff] %v407
                  %v409 = vld [vmem:[%s361 + $0x170] sm:$0xff]
                  %410 = vst [vmem:[%s362 + $0xb8] sm:$0xff] %v409
                  %v411 = vld [vmem:[%s361 + $0x180] sm:$0xff]
                  %412 = vst [vmem:[%s362 + $0xc0] sm:$0xff] %v411
                  %v413 = vld [vmem:[%s361 + $0x190] sm:$0xff]
                  %414 = vst [vmem:[%s362 + $0xc8] sm:$0xff] %v413
                  %v415 = vld [vmem:[%s361 + $0x1a0] sm:$0xff]
                  %416 = vst [vmem:[%s362 + $0xd0] sm:$0xff] %v415
                  %v417 = vld [vmem:[%s361 + $0x1b0] sm:$0xff]
                  %418 = vst [vmem:[%s362 + $0xd8] sm:$0xff] %v417
                  %v419 = vld [vmem:[%s361 + $0x1c0] sm:$0xff]
                  %420 = vst [vmem:[%s362 + $0xe0] sm:$0xff] %v419
                  %v421 = vld [vmem:[%s361 + $0x1d0] sm:$0xff]
                  %422 = vst [vmem:[%s362 + $0xe8] sm:$0xff] %v421
                  %v423 = vld [vmem:[%s361 + $0x1e0] sm:$0xff]
                  %424 = vst [vmem:[%s362 + $0xf0] sm:$0xff] %v423
                  %v425 = vld [vmem:[%s361 + $0x1f0] sm:$0xff]
                  %426 = vst [vmem:[%s362 + $0xf8] sm:$0xff] %v425
                  %v427 = vld [vmem:[%s361 + $0x200] sm:$0xff]
                  %428 = vst [vmem:[%s362 + $0x100] sm:$0xff] %v427
                  %v429 = vld [vmem:[%s361 + $0x210] sm:$0xff]
                  %430 = vst [vmem:[%s362 + $0x108] sm:$0xff] %v429
                  %v431 = vld [vmem:[%s361 + $0x220] sm:$0xff]
                  %432 = vst [vmem:[%s362 + $0x110] sm:$0xff] %v431
                  %v433 = vld [vmem:[%s361 + $0x230] sm:$0xff]
                  %434 = vst [vmem:[%s362 + $0x118] sm:$0xff] %v433
                  %v435 = vld [vmem:[%s361 + $0x240] sm:$0xff]
                  %436 = vst [vmem:[%s362 + $0x120] sm:$0xff] %v435
                  %v437 = vld [vmem:[%s361 + $0x250] sm:$0xff]
                  %438 = vst [vmem:[%s362 + $0x128] sm:$0xff] %v437
                  %v439 = vld [vmem:[%s361 + $0x260] sm:$0xff]
                  %440 = vst [vmem:[%s362 + $0x130] sm:$0xff] %v439
                  %v441 = vld [vmem:[%s361 + $0x270] sm:$0xff]
                  %442 = vst [vmem:[%s362 + $0x138] sm:$0xff] %v441
                  %v443 = vld [vmem:[%s361 + $0x280] sm:$0xff]
                  %444 = vst [vmem:[%s362 + $0x140] sm:$0xff] %v443
                  %v445 = vld [vmem:[%s361 + $0x290] sm:$0xff]
                  %446 = vst [vmem:[%s362 + $0x148] sm:$0xff] %v445
                  %v447 = vld [vmem:[%s361 + $0x2a0] sm:$0xff]
                  %448 = vst [vmem:[%s362 + $0x150] sm:$0xff] %v447
                  %v449 = vld [vmem:[%s361 + $0x2b0] sm:$0xff]
                  %450 = vst [vmem:[%s362 + $0x158] sm:$0xff] %v449
                  %v451 = vld [vmem:[%s361 + $0x2c0] sm:$0xff]
                  %452 = vst [vmem:[%s362 + $0x160] sm:$0xff] %v451
                  %v453 = vld [vmem:[%s361 + $0x2d0] sm:$0xff]
                  %454 = vst [vmem:[%s362 + $0x168] sm:$0xff] %v453
                  %v455 = vld [vmem:[%s361 + $0x2e0] sm:$0xff]
                  %456 = vst [vmem:[%s362 + $0x170] sm:$0xff] %v455
                  %v457 = vld [vmem:[%s361 + $0x2f0] sm:$0xff]
                  %458 = vst [vmem:[%s362 + $0x178] sm:$0xff] %v457
                $region94: #{projection_mlp.1} parent=88 // loop_footer
                  %s360 = sadd.s32 1, %s356
                $region95: #{projection_mlp.1} parent=88 // loop_footer_branch
                  %355 = sbr.rel target = $region91
                $region96: #{projection_mlp.1} parent=88 // loop_exit
                  _
              $region89: #{projection_mlp.1} parent=73 // pred_fallthru
                _
              // Predicated region
              $region97: #{projection_mlp.1} parent=73 // pred_check
                _
              $region98: #{projection_mlp.1} parent=73 // pred_check_branch
                %460 = sbr.rel target = $region100
              $region99: #{projection_mlp.1} parent=73 // pred_region
                _
              $region100: #{projection_mlp.1} parent=73 // pred_fallthru
                _
            $region74: #{projection_mlp.1} parent=69 // pred_fallthru
              _
            // Predicated region
            $region75: #{projection_mlp.1} parent=69 // pred_check
              _
            $region76: #{projection_mlp.1} parent=69 // pred_check_branch
              %247 = sbr.rel target = $region78
            $region77: #{projection_mlp.1} parent=69 // pred_region
              loop: start=0, step=1, limit=1
              $region79: #{projection_mlp.1} parent=77 // loop_pre_header
                _
              $region80: #{projection_mlp.1} parent=77 // loop_header
                %s250 = sphi 0, %s254
                %p251 = scmp.ge.s32.totalorder %s250, 1
                %s255 = sphi %s241, %s241
                %s256 = sphi %s236, %s236
              $region81: #{projection_mlp.1} parent=77 // loop_header_branch
                %253 = sbr.rel (%p251) target = $region85
              $region82: #{projection_mlp.1} parent=77 // loop_body
                %v257 = vld [vmem:[%s255] sm:$0xff]
                %258 = vst [vmem:[%s256] sm:$0xff] %v257
                %v259 = vld [vmem:[%s255 + $0x10] sm:$0xff]
                %260 = vst [vmem:[%s256 + $0x8] sm:$0xff] %v259
                %v261 = vld [vmem:[%s255 + $0x20] sm:$0xff]
                %262 = vst [vmem:[%s256 + $0x10] sm:$0xff] %v261
                %v263 = vld [vmem:[%s255 + $0x30] sm:$0xff]
                %264 = vst [vmem:[%s256 + $0x18] sm:$0xff] %v263
                %v265 = vld [vmem:[%s255 + $0x40] sm:$0xff]
                %266 = vst [vmem:[%s256 + $0x20] sm:$0xff] %v265
                %v267 = vld [vmem:[%s255 + $0x50] sm:$0xff]
                %268 = vst [vmem:[%s256 + $0x28] sm:$0xff] %v267
                %v269 = vld [vmem:[%s255 + $0x60] sm:$0xff]
                %270 = vst [vmem:[%s256 + $0x30] sm:$0xff] %v269
                %v271 = vld [vmem:[%s255 + $0x70] sm:$0xff]
                %272 = vst [vmem:[%s256 + $0x38] sm:$0xff] %v271
                %v273 = vld [vmem:[%s255 + $0x80] sm:$0xff]
                %274 = vst [vmem:[%s256 + $0x40] sm:$0xff] %v273
                %v275 = vld [vmem:[%s255 + $0x90] sm:$0xff]
                %276 = vst [vmem:[%s256 + $0x48] sm:$0xff] %v275
                %v277 = vld [vmem:[%s255 + $0xa0] sm:$0xff]
                %278 = vst [vmem:[%s256 + $0x50] sm:$0xff] %v277
                %v279 = vld [vmem:[%s255 + $0xb0] sm:$0xff]
                %280 = vst [vmem:[%s256 + $0x58] sm:$0xff] %v279
                %v281 = vld [vmem:[%s255 + $0xc0] sm:$0xff]
                %282 = vst [vmem:[%s256 + $0x60] sm:$0xff] %v281
                %v283 = vld [vmem:[%s255 + $0xd0] sm:$0xff]
                %284 = vst [vmem:[%s256 + $0x68] sm:$0xff] %v283
                %v285 = vld [vmem:[%s255 + $0xe0] sm:$0xff]
                %286 = vst [vmem:[%s256 + $0x70] sm:$0xff] %v285
                %v287 = vld [vmem:[%s255 + $0xf0] sm:$0xff]
                %288 = vst [vmem:[%s256 + $0x78] sm:$0xff] %v287
                %v289 = vld [vmem:[%s255 + $0x100] sm:$0xff]
                %290 = vst [vmem:[%s256 + $0x80] sm:$0xff] %v289
                %v291 = vld [vmem:[%s255 + $0x110] sm:$0xff]
                %292 = vst [vmem:[%s256 + $0x88] sm:$0xff] %v291
                %v293 = vld [vmem:[%s255 + $0x120] sm:$0xff]
                %294 = vst [vmem:[%s256 + $0x90] sm:$0xff] %v293
                %v295 = vld [vmem:[%s255 + $0x130] sm:$0xff]
                %296 = vst [vmem:[%s256 + $0x98] sm:$0xff] %v295
                %v297 = vld [vmem:[%s255 + $0x140] sm:$0xff]
                %298 = vst [vmem:[%s256 + $0xa0] sm:$0xff] %v297
                %v299 = vld [vmem:[%s255 + $0x150] sm:$0xff]
                %300 = vst [vmem:[%s256 + $0xa8] sm:$0xff] %v299
                %v301 = vld [vmem:[%s255 + $0x160] sm:$0xff]
                %302 = vst [vmem:[%s256 + $0xb0] sm:$0xff] %v301
                %v303 = vld [vmem:[%s255 + $0x170] sm:$0xff]
                %304 = vst [vmem:[%s256 + $0xb8] sm:$0xff] %v303
                %v305 = vld [vmem:[%s255 + $0x180] sm:$0xff]
                %306 = vst [vmem:[%s256 + $0xc0] sm:$0xff] %v305
                %v307 = vld [vmem:[%s255 + $0x190] sm:$0xff]
                %308 = vst [vmem:[%s256 + $0xc8] sm:$0xff] %v307
                %v309 = vld [vmem:[%s255 + $0x1a0] sm:$0xff]
                %310 = vst [vmem:[%s256 + $0xd0] sm:$0xff] %v309
                %v311 = vld [vmem:[%s255 + $0x1b0] sm:$0xff]
                %312 = vst [vmem:[%s256 + $0xd8] sm:$0xff] %v311
                %v313 = vld [vmem:[%s255 + $0x1c0] sm:$0xff]
                %314 = vst [vmem:[%s256 + $0xe0] sm:$0xff] %v313
                %v315 = vld [vmem:[%s255 + $0x1d0] sm:$0xff]
                %316 = vst [vmem:[%s256 + $0xe8] sm:$0xff] %v315
                %v317 = vld [vmem:[%s255 + $0x1e0] sm:$0xff]
                %318 = vst [vmem:[%s256 + $0xf0] sm:$0xff] %v317
                %v319 = vld [vmem:[%s255 + $0x1f0] sm:$0xff]
                %320 = vst [vmem:[%s256 + $0xf8] sm:$0xff] %v319
                %v321 = vld [vmem:[%s255 + $0x200] sm:$0xff]
                %322 = vst [vmem:[%s256 + $0x100] sm:$0xff] %v321
                %v323 = vld [vmem:[%s255 + $0x210] sm:$0xff]
                %324 = vst [vmem:[%s256 + $0x108] sm:$0xff] %v323
                %v325 = vld [vmem:[%s255 + $0x220] sm:$0xff]
                %326 = vst [vmem:[%s256 + $0x110] sm:$0xff] %v325
                %v327 = vld [vmem:[%s255 + $0x230] sm:$0xff]
                %328 = vst [vmem:[%s256 + $0x118] sm:$0xff] %v327
                %v329 = vld [vmem:[%s255 + $0x240] sm:$0xff]
                %330 = vst [vmem:[%s256 + $0x120] sm:$0xff] %v329
                %v331 = vld [vmem:[%s255 + $0x250] sm:$0xff]
                %332 = vst [vmem:[%s256 + $0x128] sm:$0xff] %v331
                %v333 = vld [vmem:[%s255 + $0x260] sm:$0xff]
                %334 = vst [vmem:[%s256 + $0x130] sm:$0xff] %v333
                %v335 = vld [vmem:[%s255 + $0x270] sm:$0xff]
                %336 = vst [vmem:[%s256 + $0x138] sm:$0xff] %v335
                %v337 = vld [vmem:[%s255 + $0x280] sm:$0xff]
                %338 = vst [vmem:[%s256 + $0x140] sm:$0xff] %v337
                %v339 = vld [vmem:[%s255 + $0x290] sm:$0xff]
                %340 = vst [vmem:[%s256 + $0x148] sm:$0xff] %v339
                %v341 = vld [vmem:[%s255 + $0x2a0] sm:$0xff]
                %342 = vst [vmem:[%s256 + $0x150] sm:$0xff] %v341
                %v343 = vld [vmem:[%s255 + $0x2b0] sm:$0xff]
                %344 = vst [vmem:[%s256 + $0x158] sm:$0xff] %v343
                %v345 = vld [vmem:[%s255 + $0x2c0] sm:$0xff]
                %346 = vst [vmem:[%s256 + $0x160] sm:$0xff] %v345
                %v347 = vld [vmem:[%s255 + $0x2d0] sm:$0xff]
                %348 = vst [vmem:[%s256 + $0x168] sm:$0xff] %v347
                %v349 = vld [vmem:[%s255 + $0x2e0] sm:$0xff]
                %350 = vst [vmem:[%s256 + $0x170] sm:$0xff] %v349
                %v351 = vld [vmem:[%s255 + $0x2f0] sm:$0xff]
                %352 = vst [vmem:[%s256 + $0x178] sm:$0xff] %v351
              $region83: #{projection_mlp.1} parent=77 // loop_footer
                %s254 = sadd.s32 1, %s250
              $region84: #{projection_mlp.1} parent=77 // loop_footer_branch
                %249 = sbr.rel target = $region80
              $region85: #{projection_mlp.1} parent=77 // loop_exit
                _
            $region78: #{projection_mlp.1} parent=69 // pred_fallthru
              _
          $region70: #{projection_mlp.1} parent=65 // pred_fallthru
            _
          %461 = vnop
        $region66: #{projection_mlp.1} parent=23 // pred_fallthru
          _
      $region24: #{projection_mlp.1} parent=5 // pred_fallthru
        _
      %p462 = scmp.le.s32.totalorder 1, %s14
      %p463 = scmp.lt.s32.totalorder %s14, 6
      %p464 = pnand %p462, %p463
      %p465 = pneg %p464
      // Predicated region
      $region101: #{projection_mlp.1} parent=5 // pred_check
        _
      $region102: #{projection_mlp.1} parent=5 // pred_check_branch
        %467 = sbr.rel (%p464) target = $region104
      $region103: #{projection_mlp.1} parent=5 // pred_region
        %s468 = ssub.s32 %s14, 1
        %s469 = sand.u32 %s31, 1
        %s470 = sand.u32 %s31, 1
        %s471 = smul.addr %s470, 32
        %s472 = scalar_lea.vmem [#allocation5], %s471
        // Predicated region
        $region105: #{projection_mlp.1} parent=103 // pred_check
          %p473 = pneg %p44
        $region106: #{projection_mlp.1} parent=103 // pred_check_branch
          %475 = sbr.rel (%p473) target = $region108
        $region107: #{projection_mlp.1} parent=103 // pred_region
          _
        $region108: #{projection_mlp.1} parent=103 // pred_fallthru
          _
        %s476 = sand.u32 %s84, 1
        %s477 = sand.u32 %s84, 1
        %s478 = smul.addr %s477, 384
        %s479 = scalar_lea.vmem [#allocation6], %s478
        // Predicated region
        $region109: #{projection_mlp.1} parent=103 // pred_check
          %p480 = pneg %p97
        $region110: #{projection_mlp.1} parent=103 // pred_check_branch
          %482 = sbr.rel (%p480) target = $region112
        $region111: #{projection_mlp.1} parent=103 // pred_region
          _
        $region112: #{projection_mlp.1} parent=103 // pred_fallthru
          _
        %s483 = sand.u32 %s31, 1
        %s484 = sand.u32 %s31, 1
        %s485 = smul.addr %s484, 32
        %s486 = scalar_lea.vmem [#allocation5], %s485
        %p487 = pneg %p44
        %p488 = pneg %p41
        %p489 = pneg %p65
        %p490 = pneg %p62
        %s491 = sand.u32 %s84, 1
        %s492 = sand.u32 %s84, 1
        %s493 = smul.addr %s492, 384
        %s494 = scalar_lea.vmem [#allocation6], %s493
        %p495 = pneg %p97
        %p496 = pneg %p94
        %p497 = pneg %p118
        %p498 = pneg %p115
        %p499 = pneg %p150
        %p500 = pneg %p147
        %s501 = sand.u32 %s137, 1
        %s502 = scalar_lea.sflag [#allocation8], %s501
        %s503 = sand.u32 %s137, 1
        %s504 = smul.addr %s503, 16
        %s505 = scalar_lea.vmem [#allocation7], %s504
        %p506 = scmp.lt.s32.totalorder %s19, 2
        %s507 = scalar_select %p506, %s19, 2
        %s508 = ssub.s32 %s19, 3
        %p509 = scmp.gt.s32.totalorder %s508, 0
        %s510 = scalar_select %p509, %s508, 0
        %s511 = ssub.s32 %s19, 3
        %p512 = scmp.gt.s32.totalorder %s511, 0
        %s513 = scalar_select %p512, %s511, 0
        %p514 = scmp.eq.s32.totalorder %s19, 0
        // Predicated region
        $region113: #{projection_mlp.1} parent=103 // pred_check
          %p515 = pneg %p514
        $region114: #{projection_mlp.1} parent=103 // pred_check_branch
          %517 = sbr.rel (%p515) target = $region116
        $region115: #{projection_mlp.1} parent=103 // pred_region
          %p519 = scmp.lt.u32.totalorder 16, 8
          %p520 = pneg %p519
          // Predicated region
          $region117: #{projection_mlp.1} parent=115 // pred_check
            _
          $region118: #{projection_mlp.1} parent=115 // pred_check_branch
            %522 = sbr.rel (%p519) target = $region120
          $region119: #{projection_mlp.1} parent=115 // pred_region
            %s537 = sand.u32 16, 7
            %p538 = scmp.eq.s32.totalorder %s537, 0
            // Predicated region
            $region132: #{projection_mlp.1} parent=119 // pred_check
              %p539 = pneg %p538
            $region133: #{projection_mlp.1} parent=119 // pred_check_branch
              %541 = sbr.rel (%p539) target = $region135
            $region134: #{projection_mlp.1} parent=119 // pred_region
              loop: start=0, step=1, limit=1
              $region136: #{projection_mlp.1} parent=134 // loop_pre_header
                _
              $region137: #{projection_mlp.1} parent=134 // loop_header
                %s543 = sphi 0, %s547
                %p544 = scmp.ge.s32.totalorder %s543, 1
                %s548 = sphi %s0, %s0
                %s549 = sphi [#allocation2], [#allocation2]
              $region138: #{projection_mlp.1} parent=134 // loop_header_branch
                %546 = sbr.rel (%p544) target = $region142
              $region139: #{projection_mlp.1} parent=134 // loop_body
                %v550 = vld [vmem:[%s548] sm:$0xff]
                %551 = vst [vmem:[%s549] sm:$0xff] %v550
                %v552 = vld [vmem:[%s548 + $0x8] sm:$0xff]
                %553 = vst [vmem:[%s549 + $0x8] sm:$0xff] %v552
              $region140: #{projection_mlp.1} parent=134 // loop_footer
                %s547 = sadd.s32 1, %s543
              $region141: #{projection_mlp.1} parent=134 // loop_footer_branch
                %542 = sbr.rel target = $region137
              $region142: #{projection_mlp.1} parent=134 // loop_exit
                _
            $region135: #{projection_mlp.1} parent=119 // pred_fallthru
              _
            %p554 = pneg %p538
            // Predicated region
            $region143: #{projection_mlp.1} parent=119 // pred_check
              _
            $region144: #{projection_mlp.1} parent=119 // pred_check_branch
              %556 = sbr.rel (%p538) target = $region146
            $region145: #{projection_mlp.1} parent=119 // pred_region
              %s557 = sand.u32 16, 7
            $region146: #{projection_mlp.1} parent=119 // pred_fallthru
              _
          $region120: #{projection_mlp.1} parent=115 // pred_fallthru
            _
          // Predicated region
          $region121: #{projection_mlp.1} parent=115 // pred_check
            %p523 = pneg %p519
          $region122: #{projection_mlp.1} parent=115 // pred_check_branch
            %525 = sbr.rel (%p523) target = $region124
          $region123: #{projection_mlp.1} parent=115 // pred_region
            %s526 = sshllo.u32 0, 16
            loop: start=0, step=1, limit=1
            $region125: #{projection_mlp.1} parent=123 // loop_pre_header
              _
            $region126: #{projection_mlp.1} parent=123 // loop_header
              %s528 = sphi 0, %s532
              %p529 = scmp.ge.s32.totalorder %s528, 1
              %s533 = sphi %s0, %s0
              %s534 = sphi [#allocation2], [#allocation2]
            $region127: #{projection_mlp.1} parent=123 // loop_header_branch
              %531 = sbr.rel (%p529) target = $region131
            $region128: #{projection_mlp.1} parent=123 // loop_body
              %v535 = vld [vmem:[%s533] sm:%s526]
              %536 = vst [vmem:[%s534] sm:%s526] %v535
            $region129: #{projection_mlp.1} parent=123 // loop_footer
              %s532 = sadd.s32 1, %s528
            $region130: #{projection_mlp.1} parent=123 // loop_footer_branch
              %527 = sbr.rel target = $region126
            $region131: #{projection_mlp.1} parent=123 // loop_exit
              _
          $region124: #{projection_mlp.1} parent=115 // pred_fallthru
            _
          // Predicated region
          $region147: #{projection_mlp.1} parent=115 // pred_check
            _
          $region148: #{projection_mlp.1} parent=115 // pred_check_branch
            %560 = sbr.rel (0) target = $region150
          $region149: #{projection_mlp.1} parent=115 // pred_region
            %561 = vsyncadd [#allocation3], 256
          $region150: #{projection_mlp.1} parent=115 // pred_fallthru
            _
          %s562 = smul.u32 16, 1
          %s563 = sshll.u32 %s562, 4
          %564 = dma.done [#allocation3], %s563
        $region116: #{projection_mlp.1} parent=103 // pred_fallthru
          _
        %p565 = scmp.lt.s32.totalorder %s19, 3
        // Predicated region
        $region151: #{projection_mlp.1} parent=103 // pred_check
          %p566 = pneg %p565
        $region152: #{projection_mlp.1} parent=103 // pred_check_branch
          %568 = sbr.rel (%p566) target = $region154
        $region153: #{projection_mlp.1} parent=103 // pred_region
          %p569 = scmp.lt.s32.totalorder %s19, 2
          %s570 = scalar_select %p569, %s19, 2
          %v571 = vld [vmem:[#allocation2] sm:$0xff]
          %v572 = vld [vmem:[#allocation2 + $0x8] sm:$0xff]
          %v573 = vld [vmem:[%s472] sm:$0xff]
          %v574 = vld [vmem:[%s472 + $0x8] sm:$0xff]
          %v575 = vld [vmem:[%s472 + $0x10] sm:$0xff]
          %v576 = vld [vmem:[%s472 + $0x18] sm:$0xff]
          %vm577 = vcmask 261120
          %v579 = vsel %vm577, %v571, 0
          %v582 = vsel %vm577, %v572, 0
          %584 = vmatprep.subr.mxu0 0.0
          %585 = vmatpush1.msra.mxu0 %v573
          %586 = vmatprep.subr.mxu0 0.0
          %587 = vmatpush1.msra.mxu0 %v574
          %588 = vmatprep.subr.mxu0 0.0
          %589 = vmatpush1.msra.mxu0 %v575
          %590 = vmatprep.subr.mxu0 0.0
          %591 = vmatpush1.msra.mxu0 %v576
          %592 = vmatprep.subr.mxu0 0.0
          %593 = vmatpush1.msra.mxu0 0.0
          %594 = vmatprep.subr.mxu0 0.0
          %595 = vmatpush1.msra.mxu0 0.0
          %596 = vmatprep.subr.mxu0 0.0
          %597 = vmatpush1.msra.mxu0 0.0
          %598 = vmatprep.subr.mxu0 0.0
          %599 = vmatpush1.msra.mxu0 0.0
          %600 = vmatprep.subr.mxu0 0.0
          %601 = vmatpush1.msra.mxu0 0.0
          %602 = vmatprep.subr.mxu0 0.0
          %603 = vmatpush1.msra.mxu0 0.0
          %604 = vmatprep.subr.mxu0 0.0
          %605 = vmatpush1.msra.mxu0 0.0
          %606 = vmatprep.subr.mxu0 0.0
          %607 = vmatpush1.msra.mxu0 0.0
          %608 = vmatprep.subr.mxu0 0.0
          %609 = vmatpush1.msra.mxu0 0.0
          %610 = vmatprep.subr.mxu0 0.0
          %611 = vmatpush1.msra.mxu0 0.0
          %612 = vmatprep.subr.mxu0 0.0
          %613 = vmatpush1.msra.mxu0 0.0
          %614 = vmatprep.subr.mxu0 0.0
          %615 = vmatpush1.msra.mxu0 0.0
          %616 = vmatprep.subr.mxu0 0.0
          %617 = vmatpush1.msra.mxu0 0.0
          %618 = vmatprep.subr.mxu0 0.0
          %619 = vmatpush1.msra.mxu0 0.0
          %620 = vmatprep.subr.mxu0 0.0
          %621 = vmatpush1.msra.mxu0 0.0
          %622 = vmatprep.subr.mxu0 0.0
          %623 = vmatpush1.msra.mxu0 0.0
          %624 = vmatprep.subr.mxu0 0.0
          %625 = vmatpush1.msra.mxu0 0.0
          %626 = vmatprep.subr.mxu0 0.0
          %627 = vmatpush1.msra.mxu0 0.0
          %628 = vmatprep.subr.mxu0 0.0
          %629 = vmatpush1.msra.mxu0 0.0
          %630 = vmatprep.subr.mxu0 0.0
          %631 = vmatpush1.msra.mxu0 0.0
          %632 = vmatprep.subr.mxu0 0.0
          %633 = vmatpush1.msra.mxu0 0.0
          %634 = vmatprep.subr.mxu0 0.0
          %635 = vmatpush1.msra.mxu0 0.0
          %636 = vmatprep.subr.mxu0 0.0
          %637 = vmatpush1.msra.mxu0 0.0
          %638 = vmatprep.subr.mxu0 0.0
          %639 = vmatpush1.msra.mxu0 0.0
          %640 = vmatprep.subr.mxu0 0.0
          %641 = vmatpush1.msra.mxu0 0.0
          %642 = vmatprep.subr.mxu0 0.0
          %643 = vmatpush1.msra.mxu0 0.0
          %644 = vmatprep.subr.mxu0 0.0
          %645 = vmatpush1.msra.mxu0 0.0
          %646 = vmatprep.subr.mxu0 0.0
          %647 = vmatpush1.msra.mxu0 0.0
          %648 = vmatprep.mubr.f32.mxu0 0.0
          %649 = vmatmul.mubr.f32.gmra.mrb[0].mxu0 %v579
          %v650 = vpop.f32.mrb[0].mxu0
          %v651 = vadd.f32 0.0, %v650
          %v652 = vpop.f32.mrb[0].mxu0
          %653 = vmatprep.mubr.f32.mxu0 0.0
          %654 = vmatmul.mubr.f32.gmra.mrb[0].mxu0 %v582
          %v655 = vpop.f32.mrb[0].mxu0
          %v656 = vadd.f32 0.0, %v655
          %v657 = vpop.f32.mrb[0].mxu0
          %658 = vdwg.mxu0
          %s659 = smul.u32 %s570, 2
          %s660 = scalar_lea.vmem %s2, %s659
          %v661 = vld [vmem:[%s660] sm:$0x3]
          %v662 = vadd.f32 %v651, %v656
          %v663 = vrot.slane %v662, 4
          %v664 = vadd.f32 %v662, %v663
          %v665 = vrot.slane %v664, 2
          %v666 = vadd.f32 %v664, %v665
          %v667 = vrot.slane %v666, 1
          %v668 = vadd.f32 %v666, %v667
          %v669 = vrcp.pop 16.0
          %v670 = vmul.f32 %v668, %v669
          %v671 = vsub.f32 %v651, %v670
          %v672 = vsub.f32 %v656, %v670
          %v673 = vmul.f32 %v671, %v671
          %v674 = vmul.f32 %v672, %v672
          %v675 = vadd.f32 %v673, %v674
          %v676 = vrot.slane %v675, 4
          %v677 = vadd.f32 %v675, %v676
          %v678 = vrot.slane %v677, 2
          %v679 = vadd.f32 %v677, %v678
          %v680 = vrot.slane %v679, 1
          %v681 = vadd.f32 %v679, %v680
          %v682 = vmul.f32 %v681, %v669
          %v683 = vadd.f32 %v682, 1e-05
          %v684 = vrsqrt.pop %v683
          %v685 = vmul.f32 %v661, %v684
          %v686 = vlaneseq
          %v687 = vshrl.u32 %v686, 7
          %v688 = vsub.s32 0, %v687
          %v689 = vrot.slane %v685, %v688
          %v690 = vmul.f32 %v671, %v689
          %v691 = vmul.f32 %v672, %v689
          %v692 = vlaneseq
          %v693 = vshrl.u32 %v692, 7
          %v694 = vsub.s32 1, %v693
          %v695 = vrot.slane %v661, %v694
          %v696 = vadd.f32 %v690, %v695
          %v697 = vadd.f32 %v691, %v695
          %v698 = vmax.f32 %v696, 0.0
          %v699 = vmax.f32 %v697, 0.0
          %s700 = smul.u32 %s570, 16
          %s701 = scalar_lea.vmem [#allocation4], %s700
          %702 = vst [vmem:[%s701] sm:$0xff] %v698
          %703 = vst [vmem:[%s701 + $0x8] sm:$0xff] %v699
        $region154: #{projection_mlp.1} parent=103 // pred_fallthru
          _
        %p704 = scmp.ge.s32.totalorder %s19, 3
        // Predicated region
        $region155: #{projection_mlp.1} parent=103 // pred_check
          %p705 = pneg %p704
        $region156: #{projection_mlp.1} parent=103 // pred_check_branch
          %707 = sbr.rel (%p705) target = $region158
        $region157: #{projection_mlp.1} parent=103 // pred_region
          %s708 = ssub.s32 %s19, 3
          %p709 = scmp.gt.s32.totalorder %s708, 0
          %s710 = scalar_select %p709, %s708, 0
          %v711 = vld [vmem:[#allocation4] sm:$0xff]
          %v712 = vld [vmem:[#allocation4 + $0x8] sm:$0xff]
          %v713 = vld [vmem:[%s479] sm:$0xff]
          %v714 = vld [vmem:[%s479 + $0x8] sm:$0xff]
          %v715 = vld [vmem:[%s479 + $0x10] sm:$0xff]
          %v716 = vld [vmem:[%s479 + $0x18] sm:$0xff]
          %v717 = vld [vmem:[%s479 + $0x20] sm:$0xff]
          %v718 = vld [vmem:[%s479 + $0x28] sm:$0xff]
          %v719 = vld [vmem:[%s479 + $0x30] sm:$0xff]
          %v720 = vld [vmem:[%s479 + $0x38] sm:$0xff]
          %v721 = vld [vmem:[%s479 + $0x40] sm:$0xff]
          %v722 = vld [vmem:[%s479 + $0x48] sm:$0xff]
          %v723 = vld [vmem:[%s479 + $0x50] sm:$0xff]
          %v724 = vld [vmem:[%s479 + $0x58] sm:$0xff]
          %v725 = vld [vmem:[%s479 + $0x60] sm:$0xff]
          %v726 = vld [vmem:[%s479 + $0x68] sm:$0xff]
          %v727 = vld [vmem:[%s479 + $0x70] sm:$0xff]
          %v728 = vld [vmem:[%s479 + $0x78] sm:$0xff]
          %s729 = scalar_lea.vmem [#allocation4], 16
          %v730 = vld [vmem:[%s729] sm:$0xff]
          %v731 = vld [vmem:[%s729 + $0x8] sm:$0xff]
          %v732 = vld [vmem:[%s479 + $0x80] sm:$0xff]
          %v733 = vld [vmem:[%s479 + $0x88] sm:$0xff]
          %v734 = vld [vmem:[%s479 + $0x90] sm:$0xff]
          %v735 = vld [vmem:[%s479 + $0x98] sm:$0xff]
          %v736 = vld [vmem:[%s479 + $0xa0] sm:$0xff]
          %v737 = vld [vmem:[%s479 + $0xa8] sm:$0xff]
          %v738 = vld [vmem:[%s479 + $0xb0] sm:$0xff]
          %v739 = vld [vmem:[%s479 + $0xb8] sm:$0xff]
          %v740 = vld [vmem:[%s479 + $0xc0] sm:$0xff]
          %v741 = vld [vmem:[%s479 + $0xc8] sm:$0xff]
          %v742 = vld [vmem:[%s479 + $0xd0] sm:$0xff]
          %v743 = vld [vmem:[%s479 + $0xd8] sm:$0xff]
          %v744 = vld [vmem:[%s479 + $0xe0] sm:$0xff]
          %v745 = vld [vmem:[%s479 + $0xe8] sm:$0xff]
          %v746 = vld [vmem:[%s479 + $0xf0] sm:$0xff]
          %v747 = vld [vmem:[%s479 + $0xf8] sm:$0xff]
          %748 = vmatprep.subr.mxu0 0.0
          %749 = vmatpush1.msra.mxu0 %v732
          %750 = vmatprep.subr.mxu0 0.0
          %751 = vmatpush1.msra.mxu0 %v733
          %752 = vmatprep.subr.mxu0 0.0
          %753 = vmatpush1.msra.mxu0 %v734
          %754 = vmatprep.subr.mxu0 0.0
          %755 = vmatpush1.msra.mxu0 %v735
          %756 = vmatprep.subr.mxu0 0.0
          %757 = vmatpush1.msra.mxu0 %v736
          %758 = vmatprep.subr.mxu0 0.0
          %759 = vmatpush1.msra.mxu0 %v737
          %760 = vmatprep.subr.mxu0 0.0
          %761 = vmatpush1.msra.mxu0 %v738
          %762 = vmatprep.subr.mxu0 0.0
          %763 = vmatpush1.msra.mxu0 %v739
          %764 = vmatprep.subr.mxu0 0.0
          %765 = vmatpush1.msra.mxu0 %v740
          %766 = vmatprep.subr.mxu0 0.0
          %767 = vmatpush1.msra.mxu0 %v741
          %768 = vmatprep.subr.mxu0 0.0
          %769 = vmatpush1.msra.mxu0 %v742
          %770 = vmatprep.subr.mxu0 0.0
          %771 = vmatpush1.msra.mxu0 %v743
          %772 = vmatprep.subr.mxu0 0.0
          %773 = vmatpush1.msra.mxu0 %v744
          %774 = vmatprep.subr.mxu0 0.0
          %775 = vmatpush1.msra.mxu0 %v745
          %776 = vmatprep.subr.mxu0 0.0
          %777 = vmatpush1.msra.mxu0 %v746
          %778 = vmatprep.subr.mxu0 0.0
          %779 = vmatpush1.msra.mxu0 %v747
          %780 = vmatprep.subr.mxu0 0.0
          %781 = vmatpush1.msra.mxu0 0.0
          %782 = vmatprep.subr.mxu0 0.0
          %783 = vmatpush1.msra.mxu0 0.0
          %784 = vmatprep.subr.mxu0 0.0
          %785 = vmatpush1.msra.mxu0 0.0
          %786 = vmatprep.subr.mxu0 0.0
          %787 = vmatpush1.msra.mxu0 0.0
          %788 = vmatprep.subr.mxu0 0.0
          %789 = vmatpush1.msra.mxu0 0.0
          %790 = vmatprep.subr.mxu0 0.0
          %791 = vmatpush1.msra.mxu0 0.0
          %792 = vmatprep.subr.mxu0 0.0
          %793 = vmatpush1.msra.mxu0 0.0
          %794 = vmatprep.subr.mxu0 0.0
          %795 = vmatpush1.msra.mxu0 0.0
          %796 = vmatprep.subr.mxu0 0.0
          %797 = vmatpush1.msra.mxu0 0.0
          %798 = vmatprep.subr.mxu0 0.0
          %799 = vmatpush1.msra.mxu0 0.0
          %800 = vmatprep.subr.mxu0 0.0
          %801 = vmatpush1.msra.mxu0 0.0
          %802 = vmatprep.subr.mxu0 0.0
          %803 = vmatpush1.msra.mxu0 0.0
          %804 = vmatprep.subr.mxu0 0.0
          %805 = vmatpush1.msra.mxu0 0.0
          %806 = vmatprep.subr.mxu0 0.0
          %807 = vmatpush1.msra.mxu0 0.0
          %808 = vmatprep.subr.mxu0 0.0
          %809 = vmatpush1.msra.mxu0 0.0
          %810 = vmatprep.subr.mxu0 0.0
          %811 = vmatpush1.msra.mxu0 0.0
          %812 = vmatprep.mubr.f32.mxu0 0.0
          %813 = vmatmul.mubr.f32.gmra.mrb[0].mxu0 %v730
          %v814 = vpop.f32.mrb[0].mxu0
          %v815 = vadd.f32 0.0, %v814
          %v816 = vpop.f32.mrb[0].mxu0
          %817 = vmatprep.mubr.f32.mxu0 0.0
          %818 = vmatmul.mubr.f32.gmra.mrb[0].mxu0 %v731
          %v819 = vpop.f32.mrb[0].mxu0
          %v820 = vadd.f32 0.0, %v819
          %v821 = vpop.f32.mrb[0].mxu0
          %822 = vdwg.mxu0
          %823 = vmatprep.subr.mxu0 0.0
          %824 = vmatpush1.msra.mxu0 %v713
          %825 = vmatprep.subr.mxu0 0.0
          %826 = vmatpush1.msra.mxu0 %v714
          %827 = vmatprep.subr.mxu0 0.0
          %828 = vmatpush1.msra.mxu0 %v715
          %829 = vmatprep.subr.mxu0 0.0
          %830 = vmatpush1.msra.mxu0 %v716
          %831 = vmatprep.subr.mxu0 0.0
          %832 = vmatpush1.msra.mxu0 %v717
          %833 = vmatprep.subr.mxu0 0.0
          %834 = vmatpush1.msra.mxu0 %v718
          %835 = vmatprep.subr.mxu0 0.0
          %836 = vmatpush1.msra.mxu0 %v719
          %837 = vmatprep.subr.mxu0 0.0
          %838 = vmatpush1.msra.mxu0 %v720
          %839 = vmatprep.subr.mxu0 0.0
          %840 = vmatpush1.msra.mxu0 %v721
          %841 = vmatprep.subr.mxu0 0.0
          %842 = vmatpush1.msra.mxu0 %v722
          %843 = vmatprep.subr.mxu0 0.0
          %844 = vmatpush1.msra.mxu0 %v723
          %845 = vmatprep.subr.mxu0 0.0
          %846 = vmatpush1.msra.mxu0 %v724
          %847 = vmatprep.subr.mxu0 0.0
          %848 = vmatpush1.msra.mxu0 %v725
          %849 = vmatprep.subr.mxu0 0.0
          %850 = vmatpush1.msra.mxu0 %v726
          %851 = vmatprep.subr.mxu0 0.0
          %852 = vmatpush1.msra.mxu0 %v727
          %853 = vmatprep.subr.mxu0 0.0
          %854 = vmatpush1.msra.mxu0 %v728
          %855 = vmatprep.subr.mxu0 0.0
          %856 = vmatpush1.msra.mxu0 0.0
          %857 = vmatprep.subr.mxu0 0.0
          %858 = vmatpush1.msra.mxu0 0.0
          %859 = vmatprep.subr.mxu0 0.0
          %860 = vmatpush1.msra.mxu0 0.0
          %861 = vmatprep.subr.mxu0 0.0
          %862 = vmatpush1.msra.mxu0 0.0
          %863 = vmatprep.subr.mxu0 0.0
          %864 = vmatpush1.msra.mxu0 0.0
          %865 = vmatprep.subr.mxu0 0.0
          %866 = vmatpush1.msra.mxu0 0.0
          %867 = vmatprep.subr.mxu0 0.0
          %868 = vmatpush1.msra.mxu0 0.0
          %869 = vmatprep.subr.mxu0 0.0
          %870 = vmatpush1.msra.mxu0 0.0
          %871 = vmatprep.subr.mxu0 0.0
          %872 = vmatpush1.msra.mxu0 0.0
          %873 = vmatprep.subr.mxu0 0.0
          %874 = vmatpush1.msra.mxu0 0.0
          %875 = vmatprep.subr.mxu0 0.0
          %876 = vmatpush1.msra.mxu0 0.0
          %877 = vmatprep.subr.mxu0 0.0
          %878 = vmatpush1.msra.mxu0 0.0
          %879 = vmatprep.subr.mxu0 0.0
          %880 = vmatpush1.msra.mxu0 0.0
          %881 = vmatprep.subr.mxu0 0.0
          %882 = vmatpush1.msra.mxu0 0.0
          %883 = vmatprep.subr.mxu0 0.0
          %884 = vmatpush1.msra.mxu0 0.0
          %885 = vmatprep.subr.mxu0 0.0
          %886 = vmatpush1.msra.mxu0 0.0
          %887 = vmatprep.mubr.f32.mxu0 0.0
          %888 = vmatmul.mubr.f32.gmra.mrb[0].mxu0 %v711
          %v889 = vpop.f32.mrb[0].mxu0
          %v890 = vadd.f32 %v815, %v889
          %v891 = vpop.f32.mrb[0].mxu0
          %892 = vmatprep.mubr.f32.mxu0 0.0
          %893 = vmatmul.mubr.f32.gmra.mrb[0].mxu0 %v712
          %v894 = vpop.f32.mrb[0].mxu0
          %v895 = vadd.f32 %v820, %v894
          %v896 = vpop.f32.mrb[0].mxu0
          %897 = vdwg.mxu0
          %s898 = scalar_lea.vmem [#allocation4], 32
          %v899 = vld [vmem:[%s898] sm:$0xff]
          %v900 = vld [vmem:[%s898 + $0x8] sm:$0xff]
          %v901 = vld [vmem:[%s479 + $0x100] sm:$0xff]
          %v902 = vld [vmem:[%s479 + $0x108] sm:$0xff]
          %v903 = vld [vmem:[%s479 + $0x110] sm:$0xff]
          %v904 = vld [vmem:[%s479 + $0x118] sm:$0xff]
          %v905 = vld [vmem:[%s479 + $0x120] sm:$0xff]
          %v906 = vld [vmem:[%s479 + $0x128] sm:$0xff]
          %v907 = vld [vmem:[%s479 + $0x130] sm:$0xff]
          %v908 = vld [vmem:[%s479 + $0x138] sm:$0xff]
          %v909 = vld [vmem:[%s479 + $0x140] sm:$0xff]
          %v910 = vld [vmem:[%s479 + $0x148] sm:$0xff]
          %v911 = vld [vmem:[%s479 + $0x150] sm:$0xff]
          %v912 = vld [vmem:[%s479 + $0x158] sm:$0xff]
          %v913 = vld [vmem:[%s479 + $0x160] sm:$0xff]
          %v914 = vld [vmem:[%s479 + $0x168] sm:$0xff]
          %v915 = vld [vmem:[%s479 + $0x170] sm:$0xff]
          %v916 = vld [vmem:[%s479 + $0x178] sm:$0xff]
          %917 = vmatprep.subr.mxu0 0.0
          %918 = vmatpush1.msra.mxu0 %v901
          %919 = vmatprep.subr.mxu0 0.0
          %920 = vmatpush1.msra.mxu0 %v902
          %921 = vmatprep.subr.mxu0 0.0
          %922 = vmatpush1.msra.mxu0 %v903
          %923 = vmatprep.subr.mxu0 0.0
          %924 = vmatpush1.msra.mxu0 %v904
          %925 = vmatprep.subr.mxu0 0.0
          %926 = vmatpush1.msra.mxu0 %v905
          %927 = vmatprep.subr.mxu0 0.0
          %928 = vmatpush1.msra.mxu0 %v906
          %929 = vmatprep.subr.mxu0 0.0
          %930 = vmatpush1.msra.mxu0 %v907
          %931 = vmatprep.subr.mxu0 0.0
          %932 = vmatpush1.msra.mxu0 %v908
          %933 = vmatprep.subr.mxu0 0.0
          %934 = vmatpush1.msra.mxu0 %v909
          %935 = vmatprep.subr.mxu0 0.0
          %936 = vmatpush1.msra.mxu0 %v910
          %937 = vmatprep.subr.mxu0 0.0
          %938 = vmatpush1.msra.mxu0 %v911
          %939 = vmatprep.subr.mxu0 0.0
          %940 = vmatpush1.msra.mxu0 %v912
          %941 = vmatprep.subr.mxu0 0.0
          %942 = vmatpush1.msra.mxu0 %v913
          %943 = vmatprep.subr.mxu0 0.0
          %944 = vmatpush1.msra.mxu0 %v914
          %945 = vmatprep.subr.mxu0 0.0
          %946 = vmatpush1.msra.mxu0 %v915
          %947 = vmatprep.subr.mxu0 0.0
          %948 = vmatpush1.msra.mxu0 %v916
          %949 = vmatprep.subr.mxu0 0.0
          %950 = vmatpush1.msra.mxu0 0.0
          %951 = vmatprep.subr.mxu0 0.0
          %952 = vmatpush1.msra.mxu0 0.0
          %953 = vmatprep.subr.mxu0 0.0
          %954 = vmatpush1.msra.mxu0 0.0
          %955 = vmatprep.subr.mxu0 0.0
          %956 = vmatpush1.msra.mxu0 0.0
          %957 = vmatprep.subr.mxu0 0.0
          %958 = vmatpush1.msra.mxu0 0.0
          %959 = vmatprep.subr.mxu0 0.0
          %960 = vmatpush1.msra.mxu0 0.0
          %961 = vmatprep.subr.mxu0 0.0
          %962 = vmatpush1.msra.mxu0 0.0
          %963 = vmatprep.subr.mxu0 0.0
          %964 = vmatpush1.msra.mxu0 0.0
          %965 = vmatprep.subr.mxu0 0.0
          %966 = vmatpush1.msra.mxu0 0.0
          %967 = vmatprep.subr.mxu0 0.0
          %968 = vmatpush1.msra.mxu0 0.0
          %969 = vmatprep.subr.mxu0 0.0
          %970 = vmatpush1.msra.mxu0 0.0
          %971 = vmatprep.subr.mxu0 0.0
          %972 = vmatpush1.msra.mxu0 0.0
          %973 = vmatprep.subr.mxu0 0.0
          %974 = vmatpush1.msra.mxu0 0.0
          %975 = vmatprep.subr.mxu0 0.0
          %976 = vmatpush1.msra.mxu0 0.0
          %977 = vmatprep.subr.mxu0 0.0
          %978 = vmatpush1.msra.mxu0 0.0
          %979 = vmatprep.subr.mxu0 0.0
          %980 = vmatpush1.msra.mxu0 0.0
          %981 = vmatprep.mubr.f32.mxu0 0.0
          %982 = vmatmul.mubr.f32.gmra.mrb[0].mxu0 %v899
          %v983 = vpop.f32.mrb[0].mxu0
          %v984 = vadd.f32 0.0, %v983
          %v985 = vpop.f32.mrb[0].mxu0
          %986 = vmatprep.mubr.f32.mxu0 0.0
          %987 = vmatmul.mubr.f32.gmra.mrb[0].mxu0 %v900
          %v988 = vpop.f32.mrb[0].mxu0
          %v989 = vadd.f32 0.0, %v988
          %v990 = vpop.f32.mrb[0].mxu0
          %991 = vdwg.mxu0
          %v992 = vadd.f32 %v890, %v984
          %v993 = vadd.f32 %v895, %v989
          %s994 = smul.u32 %s710, 2
          %s995 = scalar_lea.vmem %s4, %s994
          %v996 = vld [vmem:[%s995] sm:$0x3]
          %v997 = vadd.f32 %v992, %v993
          %v998 = vrot.slane %v997, 4
          %v999 = vadd.f32 %v997, %v998
          %v1000 = vrot.slane %v999, 2
          %v1001 = vadd.f32 %v999, %v1000
          %v1002 = vrot.slane %v1001, 1
          %v1003 = vadd.f32 %v1001, %v1002
          %v1004 = vrcp.pop 16.0
          %v1005 = vmul.f32 %v1003, %v1004
          %v1006 = vsub.f32 %v992, %v1005
          %v1007 = vsub.f32 %v993, %v1005
          %v1008 = vmul.f32 %v1006, %v1006
          %v1009 = vmul.f32 %v1007, %v1007
          %v1010 = vadd.f32 %v1008, %v1009
          %v1011 = vrot.slane %v1010, 4
          %v1012 = vadd.f32 %v1010, %v1011
          %v1013 = vrot.slane %v1012, 2
          %v1014 = vadd.f32 %v1012, %v1013
          %v1015 = vrot.slane %v1014, 1
          %v1016 = vadd.f32 %v1014, %v1015
          %v1017 = vmul.f32 %v1016, %v1004
          %v1018 = vadd.f32 %v1017, 1e-05
          %v1019 = vrsqrt.pop %v1018
          %v1020 = vmul.f32 %v996, %v1019
          %v1021 = vlaneseq
          %v1022 = vshrl.u32 %v1021, 7
          %v1023 = vsub.s32 0, %v1022
          %v1024 = vrot.slane %v1020, %v1023
          %v1025 = vmul.f32 %v1006, %v1024
          %v1026 = vmul.f32 %v1007, %v1024
          %v1027 = vlaneseq
          %v1028 = vshrl.u32 %v1027, 7
          %v1029 = vsub.s32 1, %v1028
          %v1030 = vrot.slane %v996, %v1029
          %v1031 = vadd.f32 %v1025, %v1030
          %v1032 = vadd.f32 %v1026, %v1030
          %v1033 = vmax.f32 %v1031, 0.0
          %v1034 = vmax.f32 %v1032, 0.0
          %1035 = vst [vmem:[%s505] sm:$0xff] %v1033
          %1036 = vst [vmem:[%s505 + $0x8] sm:$0xff] %v1034
        $region158: #{projection_mlp.1} parent=103 // pred_fallthru
          _
        %s1037 = sand.u32 %s137, 1
        %s1038 = scalar_lea.sflag [#allocation8], %s1037
        %s1039 = sand.u32 %s137, 1
        %s1040 = smul.addr %s1039, 16
        %s1041 = scalar_lea.vmem [#allocation7], %s1040
        // Predicated region
        $region159: #{projection_mlp.1} parent=103 // pred_check
          %p1042 = pneg %p147
        $region160: #{projection_mlp.1} parent=103 // pred_check_branch
          %1044 = sbr.rel (%p1042) target = $region162
        $region161: #{projection_mlp.1} parent=103 // pred_region
          %s1045 = ssub.s32 %s19, 3
          %p1046 = scmp.gt.s32.totalorder %s1045, 0
          %s1047 = scalar_select %p1046, %s1045, 0
          %s1049 = ssub.s32 256, 256
          %1050 = vsyncadd %s1038, %s1049
          %s1051 = smul.addr %s1047, 128
          %s1052 = scalar_lea.hbm %s5, %s1051
          %s1053 = sshll.u32 %s1041, 4
          %s1054 = int_to_ptr.vmem [resolvable:$true] %s1053
          %1059 = dma.vmem_to_hbm [thread:$0]  %s1054, 256, %s1052, %s1038, 128, 256, 8
        $region162: #{projection_mlp.1} parent=103 // pred_fallthru
          _
      $region104: #{projection_mlp.1} parent=5 // pred_fallthru
        _
      %p1060 = scmp.le.s32.totalorder 2, %s14
      // Predicated region
      $region163: #{projection_mlp.1} parent=5 // pred_check
        %p1061 = pneg %p1060
      $region164: #{projection_mlp.1} parent=5 // pred_check_branch
        %1063 = sbr.rel (%p1061) target = $region166
      $region165: #{projection_mlp.1} parent=5 // pred_region
        %s1064 = ssub.s32 %s14, 2
        // Predicated region
        $region167: #{projection_mlp.1} parent=165 // pred_check
          %p1065 = pneg %p153
        $region168: #{projection_mlp.1} parent=165 // pred_check_branch
          %1067 = sbr.rel (%p1065) target = $region170
        $region169: #{projection_mlp.1} parent=165 // pred_region
          %s1068 = sand.u32 %s138, 1
          %s1069 = scalar_lea.sflag [#allocation8], %s1068
          %s1070 = sand.u32 %s138, 1
          %s1071 = smul.addr %s1070, 16
          %s1072 = scalar_lea.vmem [#allocation7], %s1071
          %1073 = dma.done %s1069, 256
        $region170: #{projection_mlp.1} parent=165 // pred_fallthru
          _
      $region166: #{projection_mlp.1} parent=5 // pred_fallthru
        _
    $region6: #{projection_mlp.1} parent=1 // loop_footer
      %s18 = sadd.s32 1, %s14
    $region7: #{projection_mlp.1} parent=1 // loop_footer_branch
      %13 = sbr.rel target = $region3
    $region8: #{projection_mlp.1} parent=1 // loop_exit
      _
    %1074 = vsyncpa [#allocation8], 1
    %s1075 = scalar_lea.sflag [#allocation8], 1
    %1076 = vsyncpa %s1075, 1
  %1077 = vsyncmov [#allocation3]
  %s1078 = vpop.sfrf %1077
  %p1079 = scmp.eq.s32.totalorder %s1078, 0
  %p1080 = pneg %p1079
  %1082 = shalt.err (%p1080)

</llo_original>
